<compile_context>
chip_gen: v7x
topology: tpu7x:2x2x1
jax: 0.10.0
libtpu: 0.0.40
codegen_flags: <defaults>
</compile_context>

<pallas_src>
import jax
import jax.numpy as jnp
from jax.experimental import pallas as pl
from jax.experimental.pallas import tpu as pltpu  # noqa: F401  (TPU backend)

H_PAD = 8      # hidden width padded 5 -> 8 (sublane-aligned, free for f32)
OUT_PAD = 128  # lane-dense width for the final (N, 1) output

_HIGHEST = jax.lax.Precision.HIGHEST


def gcn_kernel(adj_ref, feat_ref, w1b1_ref, w2b2_ref, out_ref):
    adj = adj_ref[...]

    # ---- layer 1: h = relu( adj @ (features @ w1) + b1 ) ----
    p1 = w1b1_ref[...]            # (F_in + 1, H_PAD): rows [:-1] = w1, row [-1] = b1
    w1 = p1[:-1, :]
    b1 = p1[-1:, :]
    fw1 = jnp.dot(feat_ref[...], w1,
                  preferred_element_type=jnp.float32, precision=_HIGHEST)
    h = jnp.maximum(
        jnp.dot(adj, fw1,
                preferred_element_type=jnp.float32, precision=_HIGHEST) + b1,
        0.0)

    # ---- layer 2: y = (adj @ h) @ w2 + b2  (pad to 128 lanes only at the end) ----
    p2 = w2b2_ref[...]            # (H_PAD + 1, OUT_PAD): rows [:-1] = w2, row [-1] = b2
    w2 = p2[:-1, :]
    b2 = p2[-1:, :]
    z = jnp.dot(adj, h,
                preferred_element_type=jnp.float32, precision=_HIGHEST)
    y = jnp.dot(z, w2,
                preferred_element_type=jnp.float32, precision=_HIGHEST) + b2

    out_ref[...] = y.astype(out_ref.dtype)   # unmasked, lane-dense 128-lane store


def pack_params(w1, b1, w2, b2):
    """One-time (init-time) packing: pad H -> H_PAD, OUT -> OUT_PAD, fuse bias.

    Padding lanes carry zero weight and zero bias so they hold exact zeros
    everywhere and do not change the result.
    """
    f_in, h = w1.shape
    w1p = jnp.zeros((f_in, H_PAD), jnp.float32).at[:, :h].set(w1)
    b1p = jnp.zeros((1, H_PAD), jnp.float32).at[:, :h].set(b1)
    w1b1 = jnp.concatenate([w1p, b1p], axis=0)                    # (F_in+1, H_PAD)

    w2p = jnp.zeros((H_PAD, OUT_PAD), jnp.float32).at[:h, :1].set(w2)
    b2p = jnp.zeros((1, OUT_PAD), jnp.float32).at[:, :1].set(b2)
    w2b2 = jnp.concatenate([w2p, b2p], axis=0)                    # (H_PAD+1, OUT_PAD)
    return w1b1, w2b2


@jax.jit
def gcn_forward(adj, features, w1b1, w2b2):
    """Forward pass with pre-packed parameters (pack_params called at init)."""
    N, F_in = features.shape
    h_pad = w1b1.shape[1]

    full = lambda a: pl.BlockSpec(a.shape, lambda: (0,) * a.ndim)

    # Logical work (output width 1, not the 128 padded lanes).
    flops = 2.0 * (N * F_in * h_pad      # features @ w1
                   + N * N * h_pad       # adj @ fw1
                   + N * N * h_pad       # adj @ h
                   + N * h_pad * 1)      # z @ w2
    bytes_accessed = 4 * (N * N + N * F_in + w1b1.size + w2b2.size + N * OUT_PAD)

    out = pl.pallas_call(
        gcn_kernel,
        out_shape=jax.ShapeDtypeStruct((N, OUT_PAD), jnp.float32),
        in_specs=[full(adj), full(features), full(w1b1), full(w2b2)],
        out_specs=pl.BlockSpec((N, OUT_PAD), lambda: (0, 0)),
        cost_estimate=pl.CostEstimate(
            flops=int(flops), transcendentals=0,
            bytes_accessed=int(bytes_accessed)),
    )(adj, features, w1b1, w2b2)

    return out[:, :1]   # drop the zero padding lanes -> (N, 1)


def _reference(adj, features, w1, b1, w2, b2):
    hp = jax.lax.Precision.HIGHEST
    h = jnp.maximum(
        jnp.dot(jnp.dot(adj, features, precision=hp), w1, precision=hp) + b1, 0.0)
    return jnp.dot(jnp.dot(adj, h, precision=hp), w2, precision=hp) + b2


if __name__ == "__main__":
    # Module defaults: input_size=34, hidden_size=5 (karate-club-sized graph).
    N, F_IN, H = 34, 34, 5

    key = jax.random.PRNGKey(0)
    k_adj, k_feat, k_w1, k_b1, k_w2, k_b2 = jax.random.split(key, 6)

    # Symmetric, row-normalized adjacency (deterministic, synthetic).
    a = jax.random.uniform(k_adj, (N, N), dtype=jnp.float32)
    adj = ((a + a.T) > 1.0).astype(jnp.float32) + jnp.eye(N, dtype=jnp.float32)
    deg = jnp.sum(adj, axis=1, keepdims=True)
    adj = adj / deg

    features = jax.random.normal(k_feat, (N, F_IN), dtype=jnp.float32)

    # torch Linear: y = x @ W.T + b; weights stored here pre-transposed (in, out).
    w1 = jax.random.uniform(k_w1, (F_IN, H), minval=-0.1, maxval=0.1, dtype=jnp.float32)
    b1 = jax.random.uniform(k_b1, (1, H), minval=-0.1, maxval=0.1, dtype=jnp.float32)
    w2 = jax.random.uniform(k_w2, (H, 1), minval=-0.3, maxval=0.3, dtype=jnp.float32)
    b2 = jax.random.uniform(k_b2, (1, 1), minval=-0.3, maxval=0.3, dtype=jnp.float32)

    # One-time parameter packing (model init), NOT part of the per-call path.
    w1b1, w2b2 = pack_params(w1, b1, w2, b2)
    w1b1, w2b2 = jax.block_until_ready((w1b1, w2b2))

    out = gcn_forward(adj, features, w1b1, w2b2)
    out = jax.block_until_ready(out)

    ref = _reference(adj, features, w1, b1, w2, b2)
    assert out.shape == (N, 1)
    assert jnp.allclose(out, ref, atol=1e-5, rtol=1e-5), "mismatch vs JAX reference"

    print("KERNEL_OK")
</pallas_src>

<mosaic_0001>
module attributes {stable_mosaic.version = 11 : i64} {
  func.func @gcn_kernel(%arg0: memref<34x34xf32, #tpu.memory_space<vmem>>, %arg1: memref<34x34xf32, #tpu.memory_space<vmem>>, %arg2: memref<35x8xf32, #tpu.memory_space<vmem>>, %arg3: memref<9x128xf32, #tpu.memory_space<vmem>>, %arg4: memref<34x128xf32, #tpu.memory_space<vmem>>) attributes {dimension_semantics = [], scalar_prefetch = 0 : i64, scratch_operands = 0 : i64, tpu.core_type = #tpu.core_type<tc>} {
    %c0 = arith.constant 0 : index
    %c0_0 = arith.constant 0 : index
    %0 = vector.load %arg0[%c0, %c0_0] : memref<34x34xf32, #tpu.memory_space<vmem>>, vector<34x34xf32>
    %c0_1 = arith.constant 0 : index
    %c0_2 = arith.constant 0 : index
    %1 = vector.load %arg2[%c0_1, %c0_2] : memref<35x8xf32, #tpu.memory_space<vmem>>, vector<35x8xf32>
    %2 = vector.extract_strided_slice %1 {offsets = [0, 0], sizes = [34, 8], strides = [1, 1]} : vector<35x8xf32> to vector<34x8xf32>
    %3 = vector.extract_strided_slice %1 {offsets = [34, 0], sizes = [1, 8], strides = [1, 1]} : vector<35x8xf32> to vector<1x8xf32>
    %c0_3 = arith.constant 0 : index
    %c0_4 = arith.constant 0 : index
    %4 = vector.load %arg1[%c0_3, %c0_4] : memref<34x34xf32, #tpu.memory_space<vmem>>, vector<34x34xf32>
    %cst = arith.constant dense<0.000000e+00> : vector<34x8xf32>
    %5 = tpu.matmul %4, %2, %cst {dimension_numbers = #tpu.dot_dimension_numbers<[1], [0], [0], [1], [0, 0, 1, 1], [], []>, precision = #tpu.contract_precision<fp32>} : vector<34x34xf32>, vector<34x8xf32>, vector<34x8xf32> -> vector<34x8xf32>
    %cst_5 = arith.constant dense<0.000000e+00> : vector<34x8xf32>
    %6 = tpu.matmul %0, %5, %cst_5 {dimension_numbers = #tpu.dot_dimension_numbers<[1], [0], [0], [1], [0, 0, 1, 1], [], []>, precision = #tpu.contract_precision<fp32>} : vector<34x34xf32>, vector<34x8xf32>, vector<34x8xf32> -> vector<34x8xf32>
    %7 = vector.broadcast %3 : vector<1x8xf32> to vector<34x8xf32>
    %8 = arith.addf %6, %7 : vector<34x8xf32>
    %cst_6 = arith.constant 0.000000e+00 : f32
    %9 = vector.broadcast %cst_6 : f32 to vector<34x8xf32>
    %10 = arith.maximumf %8, %9 : vector<34x8xf32>
    %c0_7 = arith.constant 0 : index
    %c0_8 = arith.constant 0 : index
    %11 = vector.load %arg3[%c0_7, %c0_8] : memref<9x128xf32, #tpu.memory_space<vmem>>, vector<9x128xf32>
    %12 = vector.extract_strided_slice %11 {offsets = [0, 0], sizes = [8, 128], strides = [1, 1]} : vector<9x128xf32> to vector<8x128xf32>
    %13 = vector.extract_strided_slice %11 {offsets = [8, 0], sizes = [1, 128], strides = [1, 1]} : vector<9x128xf32> to vector<1x128xf32>
    %cst_9 = arith.constant dense<0.000000e+00> : vector<34x8xf32>
    %14 = tpu.matmul %0, %10, %cst_9 {dimension_numbers = #tpu.dot_dimension_numbers<[1], [0], [0], [1], [0, 0, 1, 1], [], []>, precision = #tpu.contract_precision<fp32>} : vector<34x34xf32>, vector<34x8xf32>, vector<34x8xf32> -> vector<34x8xf32>
    %cst_10 = arith.constant dense<0.000000e+00> : vector<34x128xf32>
    %15 = tpu.matmul %14, %12, %cst_10 {dimension_numbers = #tpu.dot_dimension_numbers<[1], [0], [0], [1], [0, 0, 1, 1], [], []>, precision = #tpu.contract_precision<fp32>} : vector<34x8xf32>, vector<8x128xf32>, vector<34x128xf32> -> vector<34x128xf32>
    %16 = vector.broadcast %13 : vector<1x128xf32> to vector<34x128xf32>
    %17 = arith.addf %15, %16 : vector<34x128xf32>
    %c0_11 = arith.constant 0 : index
    %c0_12 = arith.constant 0 : index
    %18 = vector.load %arg4[%c0_11, %c0_12] : memref<34x128xf32, #tpu.memory_space<vmem>>, vector<34x128xf32>
    tpu.vector_store %arg4[%c0_11, %c0_12], %17 {strides = array<i32>} : memref<34x128xf32, #tpu.memory_space<vmem>>, vector<34x128xf32>,
    return
  }
}

</mosaic_0001>

<llo_original>
// kernel: gcn_forward.1
$region0: #{gcn_forward.1}
  #allocation0 [shape = 'u32[]', space=smem, size = 0x4, offset = 0x4, fixed_abs, tag = 'smem constant byte address 0x4 - core index']
  #allocation1 [shape = 'u32[144,128]{1,0:T(1,128)}', space=vmem, size = 0x12000, scoped, tag = 'internal scratch']
  %s0 = inlined_call_operand.vmem [shape: f32[34,34], index: 0, kind: input, shape index: {}]
  %s1 = inlined_call_operand.hbm [shape: f32[34,34], index: 1, kind: input, shape index: {}]
  %s2 = inlined_call_operand.vmem [shape: f32[35,8], index: 2, kind: input, shape index: {}]
  %s3 = inlined_call_operand.vmem [shape: f32[9,128], index: 3, kind: input, shape index: {}]
  %s4 = inlined_call_operand.vmem [shape: f32[34,128], index: 4, kind: output, shape index: {}]
  %s5 = sld [smem:[#allocation0]]
  $region30: #{gcn_forward.1} parent=0
    _
  %s7 = ssub.s32 1, %s5
  %s8 = scalar_select 0, %s7, %s5
  $region1: #{gcn_forward.1} parent=0
    #allocation2 [shape = 'u8[20480]{0}', space=vmem, size = 0x5000, scoped, tag = 'input window, operand 1, single buffered']
    #allocation3 [shape = 's32[1]{0}', space=sflag, size = 0x4, scoped, tag = 'scoped memory for gcn_forward.1']
    %9 = vsyncpa [#allocation3], 0
    // Predicated region
    $region2: #{gcn_forward.1} parent=1 // pred_check
      _
    $region3: #{gcn_forward.1} parent=1 // pred_check_branch
      %11 = sbr.rel (0) target = $region5
    $region4: #{gcn_forward.1} parent=1 // pred_region
      _
    $region5: #{gcn_forward.1} parent=1 // pred_fallthru
      _
    // Predicated region
    $region6: #{gcn_forward.1} parent=1 // pred_check
      _
    $region7: #{gcn_forward.1} parent=1 // pred_check_branch
      %13 = sbr.rel (0) target = $region9
    $region8: #{gcn_forward.1} parent=1 // pred_region
      %s15 = ssub.s32 640, 640
      %16 = vsyncadd [#allocation3], %s15
      %s17 = sshll.u32 [#allocation2], 4
      %s18 = int_to_ptr.vmem [resolvable:$true] %s17
      %23 = dma.hbm_to_vmem [thread:$0]  %s1, 640, %s18, [#allocation3], 128, 128, 8
    $region9: #{gcn_forward.1} parent=1 // pred_fallthru
      _
    // Predicated region
    $region10: #{gcn_forward.1} parent=1 // pred_check
      _
    $region11: #{gcn_forward.1} parent=1 // pred_check_branch
      %25 = sbr.rel (0) target = $region13
    $region12: #{gcn_forward.1} parent=1 // pred_region
      _
    $region13: #{gcn_forward.1} parent=1 // pred_fallthru
      _
    // Predicated region
    $region14: #{gcn_forward.1} parent=1 // pred_check
      _
    $region15: #{gcn_forward.1} parent=1 // pred_check_branch
      %27 = sbr.rel (0) target = $region17
    $region16: #{gcn_forward.1} parent=1 // pred_region
      _
    $region17: #{gcn_forward.1} parent=1 // pred_fallthru
      _
    // Predicated region
    $region18: #{gcn_forward.1} parent=1 // pred_check
      _
    $region19: #{gcn_forward.1} parent=1 // pred_check_branch
      %29 = sbr.rel (0) target = $region21
    $region20: #{gcn_forward.1} parent=1 // pred_region
      %30 = dma.done [#allocation3], 640
    $region21: #{gcn_forward.1} parent=1 // pred_fallthru
      _
    %v31 = vld [vmem:[%s0] sm:$0xff]
    %v32 = vld [vmem:[%s0 + $0x8] sm:$0xff]
    %v33 = vld [vmem:[%s0 + $0x10] sm:$0xff]
    %v34 = vld [vmem:[%s0 + $0x18] sm:$0xff]
    %v35 = vld [vmem:[%s0 + $0x20] sm:$0x3]
    %v36 = vld [vmem:[%s2] sm:$0xff]
    %v37 = vld [vmem:[%s2 + $0x8] sm:$0xff]
    %v38 = vld [vmem:[%s2 + $0x10] sm:$0xff]
    %v39 = vld [vmem:[%s2 + $0x18] sm:$0xff]
    %v40 = vld [vmem:[%s2 + $0x20] sm:$0x7]
    %v41 = vld [vmem:[#allocation2] sm:$0xff]
    %v42 = vld [vmem:[#allocation2 + $0x8] sm:$0xff]
    %v43 = vld [vmem:[#allocation2 + $0x10] sm:$0xff]
    %v44 = vld [vmem:[#allocation2 + $0x18] sm:$0xff]
    %v45 = vld [vmem:[#allocation2 + $0x20] sm:$0x3]
    %vm46 = vcmask 277504
    %v48 = vsel %vm46, %v41, 0
    %v51 = vsel %vm46, %v42, 0
    %v54 = vsel %vm46, %v43, 0
    %v57 = vsel %vm46, %v44, 0
    %v60 = vsel %vm46, %v45, 0
    %vm62 = vcmask 1041408
    %v64 = vsel %vm62, %v40, 0
    %66 = vmatprep.subr.mxu0 0.0
    %v67 = vand.u32 %v36, 4294901760
    %68 = vmatpush1.msra.mxu0 %v67
    %69 = vmatprep.subr.mxu0 0.0
    %v70 = vand.u32 %v37, 4294901760
    %71 = vmatpush1.msra.mxu0 %v70
    %72 = vmatprep.subr.mxu0 0.0
    %v73 = vand.u32 %v38, 4294901760
    %74 = vmatpush1.msra.mxu0 %v73
    %75 = vmatprep.subr.mxu0 0.0
    %v76 = vand.u32 %v39, 4294901760
    %77 = vmatpush1.msra.mxu0 %v76
    %78 = vmatprep.subr.mxu0 0.0
    %v79 = vand.u32 %v64, 4294901760
    %80 = vmatpush1.msra.mxu0 %v79
    %81 = vmatprep.subr.mxu0 0.0
    %82 = vmatpush1.msra.mxu0 0.0
    %83 = vmatprep.subr.mxu0 0.0
    %84 = vmatpush1.msra.mxu0 0.0
    %85 = vmatprep.subr.mxu0 0.0
    %86 = vmatpush1.msra.mxu0 0.0
    %87 = vmatprep.subr.mxu0 0.0
    %88 = vmatpush1.msra.mxu0 0.0
    %89 = vmatprep.subr.mxu0 0.0
    %90 = vmatpush1.msra.mxu0 0.0
    %91 = vmatprep.subr.mxu0 0.0
    %92 = vmatpush1.msra.mxu0 0.0
    %93 = vmatprep.subr.mxu0 0.0
    %94 = vmatpush1.msra.mxu0 0.0
    %95 = vmatprep.subr.mxu0 0.0
    %96 = vmatpush1.msra.mxu0 0.0
    %97 = vmatprep.subr.mxu0 0.0
    %98 = vmatpush1.msra.mxu0 0.0
    %99 = vmatprep.subr.mxu0 0.0
    %100 = vmatpush1.msra.mxu0 0.0
    %101 = vmatprep.subr.mxu0 0.0
    %102 = vmatpush1.msra.mxu0 0.0
    %103 = vmatprep.subr.mxu0 0.0
    %104 = vmatpush1.msra.mxu0 0.0
    %105 = vmatprep.subr.mxu0 0.0
    %106 = vmatpush1.msra.mxu0 0.0
    %107 = vmatprep.subr.mxu0 0.0
    %108 = vmatpush1.msra.mxu0 0.0
    %109 = vmatprep.subr.mxu0 0.0
    %110 = vmatpush1.msra.mxu0 0.0
    %111 = vmatprep.subr.mxu0 0.0
    %112 = vmatpush1.msra.mxu0 0.0
    %113 = vmatprep.subr.mxu0 0.0
    %114 = vmatpush1.msra.mxu0 0.0
    %115 = vmatprep.subr.mxu0 0.0
    %116 = vmatpush1.msra.mxu0 0.0
    %117 = vmatprep.subr.mxu0 0.0
    %118 = vmatpush1.msra.mxu0 0.0
    %119 = vmatprep.subr.mxu0 0.0
    %120 = vmatpush1.msra.mxu0 0.0
    %121 = vmatprep.subr.mxu0 0.0
    %122 = vmatpush1.msra.mxu0 0.0
    %123 = vmatprep.subr.mxu0 0.0
    %124 = vmatpush1.msra.mxu0 0.0
    %125 = vmatprep.subr.mxu0 0.0
    %126 = vmatpush1.msra.mxu0 0.0
    %127 = vmatprep.subr.mxu0 0.0
    %128 = vmatpush1.msra.mxu0 0.0
    %129 = vmatprep.subr.mxu0 0.0
    %130 = vmatpush1.msra.mxu0 0.0
    %131 = vmatprep.subr.mxu0 0.0
    %132 = vmatpush1.msra.mxu0 0.0
    %133 = vmatprep.subr.mxu0 0.0
    %134 = vmatpush1.msra.mxu0 0.0
    %135 = vmatprep.mubr.f32.mxu0 0.0
    %v136 = vand.u32 %v48, 4294901760
    %v137 = vsub.f32 %v48, %v136
    %v138 = vand.u32 %v137, 4294901760
    %v139 = vsub.f32 %v137, %v138
    %v140 = vand.u32 %v139, 4294901760
    %141 = vmatmul.mubr.f32.gmra.mrb[0].mxu0 %v140
    %v142 = vpop.f32.mrb[0].mxu0
    %v143 = vadd.f32 0.0, %v142
    %v144 = vpop.f32.mrb[0].mxu0
    %145 = vmatprep.mubr.f32.mxu0 0.0
    %v146 = vand.u32 %v51, 4294901760
    %v147 = vsub.f32 %v51, %v146
    %v148 = vand.u32 %v147, 4294901760
    %v149 = vsub.f32 %v147, %v148
    %v150 = vand.u32 %v149, 4294901760
    %151 = vmatmul.mubr.f32.gmra.mrb[0].mxu0 %v150
    %v152 = vpop.f32.mrb[0].mxu0
    %v153 = vadd.f32 0.0, %v152
    %v154 = vpop.f32.mrb[0].mxu0
    %155 = vmatprep.mubr.f32.mxu0 0.0
    %v156 = vand.u32 %v54, 4294901760
    %v157 = vsub.f32 %v54, %v156
    %v158 = vand.u32 %v157, 4294901760
    %v159 = vsub.f32 %v157, %v158
    %v160 = vand.u32 %v159, 4294901760
    %161 = vmatmul.mubr.f32.gmra.mrb[0].mxu0 %v160
    %v162 = vpop.f32.mrb[0].mxu0
    %v163 = vadd.f32 0.0, %v162
    %v164 = vpop.f32.mrb[0].mxu0
    %165 = vmatprep.mubr.f32.mxu0 0.0
    %v166 = vand.u32 %v57, 4294901760
    %v167 = vsub.f32 %v57, %v166
    %v168 = vand.u32 %v167, 4294901760
    %v169 = vsub.f32 %v167, %v168
    %v170 = vand.u32 %v169, 4294901760
    %171 = vmatmul.mubr.f32.gmra.mrb[0].mxu0 %v170
    %v172 = vpop.f32.mrb[0].mxu0
    %v173 = vadd.f32 0.0, %v172
    %v174 = vpop.f32.mrb[0].mxu0
    %175 = vmatprep.mubr.f32.mxu0 0.0
    %v176 = vand.u32 %v60, 4294901760
    %v177 = vsub.f32 %v60, %v176
    %v178 = vand.u32 %v177, 4294901760
    %v179 = vsub.f32 %v177, %v178
    %v180 = vand.u32 %v179, 4294901760
    %181 = vmatmul.mubr.f32.gmra.mrb[0].mxu0 %v180
    %v182 = vpop.f32.mrb[0].mxu0
    %v183 = vadd.f32 0.0, %v182
    %v184 = vpop.f32.mrb[0].mxu0
    %185 = vdwg.mxu0
    %186 = vmatprep.subr.mxu0 0.0
    %v187 = vand.u32 %v36, 4294901760
    %v188 = vsub.f32 %v36, %v187
    %v189 = vand.u32 %v188, 4294901760
    %v190 = vsub.f32 %v188, %v189
    %v191 = vand.u32 %v190, 4294901760
    %192 = vmatpush1.msra.mxu0 %v191
    %193 = vmatprep.subr.mxu0 0.0
    %v194 = vand.u32 %v37, 4294901760
    %v195 = vsub.f32 %v37, %v194
    %v196 = vand.u32 %v195, 4294901760
    %v197 = vsub.f32 %v195, %v196
    %v198 = vand.u32 %v197, 4294901760
    %199 = vmatpush1.msra.mxu0 %v198
    %200 = vmatprep.subr.mxu0 0.0
    %v201 = vand.u32 %v38, 4294901760
    %v202 = vsub.f32 %v38, %v201
    %v203 = vand.u32 %v202, 4294901760
    %v204 = vsub.f32 %v202, %v203
    %v205 = vand.u32 %v204, 4294901760
    %206 = vmatpush1.msra.mxu0 %v205
    %207 = vmatprep.subr.mxu0 0.0
    %v208 = vand.u32 %v39, 4294901760
    %v209 = vsub.f32 %v39, %v208
    %v210 = vand.u32 %v209, 4294901760
    %v211 = vsub.f32 %v209, %v210
    %v212 = vand.u32 %v211, 4294901760
    %213 = vmatpush1.msra.mxu0 %v212
    %214 = vmatprep.subr.mxu0 0.0
    %v215 = vand.u32 %v64, 4294901760
    %v216 = vsub.f32 %v64, %v215
    %v217 = vand.u32 %v216, 4294901760
    %v218 = vsub.f32 %v216, %v217
    %v219 = vand.u32 %v218, 4294901760
    %220 = vmatpush1.msra.mxu0 %v219
    %221 = vmatprep.subr.mxu0 0.0
    %222 = vmatpush1.msra.mxu0 0.0
    %223 = vmatprep.subr.mxu0 0.0
    %224 = vmatpush1.msra.mxu0 0.0
    %225 = vmatprep.subr.mxu0 0.0
    %226 = vmatpush1.msra.mxu0 0.0
    %227 = vmatprep.subr.mxu0 0.0
    %228 = vmatpush1.msra.mxu0 0.0
    %229 = vmatprep.subr.mxu0 0.0
    %230 = vmatpush1.msra.mxu0 0.0
    %231 = vmatprep.subr.mxu0 0.0
    %232 = vmatpush1.msra.mxu0 0.0
    %233 = vmatprep.subr.mxu0 0.0
    %234 = vmatpush1.msra.mxu0 0.0
    %235 = vmatprep.subr.mxu0 0.0
    %236 = vmatpush1.msra.mxu0 0.0
    %237 = vmatprep.subr.mxu0 0.0
    %238 = vmatpush1.msra.mxu0 0.0
    %239 = vmatprep.subr.mxu0 0.0
    %240 = vmatpush1.msra.mxu0 0.0
    %241 = vmatprep.subr.mxu0 0.0
    %242 = vmatpush1.msra.mxu0 0.0
    %243 = vmatprep.subr.mxu0 0.0
    %244 = vmatpush1.msra.mxu0 0.0
    %245 = vmatprep.subr.mxu0 0.0
    %246 = vmatpush1.msra.mxu0 0.0
    %247 = vmatprep.subr.mxu0 0.0
    %248 = vmatpush1.msra.mxu0 0.0
    %249 = vmatprep.subr.mxu0 0.0
    %250 = vmatpush1.msra.mxu0 0.0
    %251 = vmatprep.subr.mxu0 0.0
    %252 = vmatpush1.msra.mxu0 0.0
    %253 = vmatprep.subr.mxu0 0.0
    %254 = vmatpush1.msra.mxu0 0.0
    %255 = vmatprep.subr.mxu0 0.0
    %256 = vmatpush1.msra.mxu0 0.0
    %257 = vmatprep.subr.mxu0 0.0
    %258 = vmatpush1.msra.mxu0 0.0
    %259 = vmatprep.subr.mxu0 0.0
    %260 = vmatpush1.msra.mxu0 0.0
    %261 = vmatprep.subr.mxu0 0.0
    %262 = vmatpush1.msra.mxu0 0.0
    %263 = vmatprep.subr.mxu0 0.0
    %264 = vmatpush1.msra.mxu0 0.0
    %265 = vmatprep.subr.mxu0 0.0
    %266 = vmatpush1.msra.mxu0 0.0
    %267 = vmatprep.subr.mxu0 0.0
    %268 = vmatpush1.msra.mxu0 0.0
    %269 = vmatprep.subr.mxu0 0.0
    %270 = vmatpush1.msra.mxu0 0.0
    %271 = vmatprep.subr.mxu0 0.0
    %272 = vmatpush1.msra.mxu0 0.0
    %273 = vmatprep.subr.mxu0 0.0
    %274 = vmatpush1.msra.mxu0 0.0
    %275 = vmatprep.mubr.f32.mxu0 0.0
    %v276 = vand.u32 %v48, 4294901760
    %277 = vmatmul.mubr.f32.gmra.mrb[0].mxu0 %v276
    %v278 = vpop.f32.mrb[0].mxu0
    %v279 = vadd.f32 %v143, %v278
    %v280 = vpop.f32.mrb[0].mxu0
    %281 = vmatprep.mubr.f32.mxu0 0.0
    %v282 = vand.u32 %v51, 4294901760
    %283 = vmatmul.mubr.f32.gmra.mrb[0].mxu0 %v282
    %v284 = vpop.f32.mrb[0].mxu0
    %v285 = vadd.f32 %v153, %v284
    %v286 = vpop.f32.mrb[0].mxu0
    %287 = vmatprep.mubr.f32.mxu0 0.0
    %v288 = vand.u32 %v54, 4294901760
    %289 = vmatmul.mubr.f32.gmra.mrb[0].mxu0 %v288
    %v290 = vpop.f32.mrb[0].mxu0
    %v291 = vadd.f32 %v163, %v290
    %v292 = vpop.f32.mrb[0].mxu0
    %293 = vmatprep.mubr.f32.mxu0 0.0
    %v294 = vand.u32 %v57, 4294901760
    %295 = vmatmul.mubr.f32.gmra.mrb[0].mxu0 %v294
    %v296 = vpop.f32.mrb[0].mxu0
    %v297 = vadd.f32 %v173, %v296
    %v298 = vpop.f32.mrb[0].mxu0
    %299 = vmatprep.mubr.f32.mxu0 0.0
    %v300 = vand.u32 %v60, 4294901760
    %301 = vmatmul.mubr.f32.gmra.mrb[0].mxu0 %v300
    %v302 = vpop.f32.mrb[0].mxu0
    %v303 = vadd.f32 %v183, %v302
    %v304 = vpop.f32.mrb[0].mxu0
    %305 = vdwg.mxu0
    %306 = vmatprep.subr.mxu0 0.0
    %v307 = vand.u32 %v36, 4294901760
    %v308 = vsub.f32 %v36, %v307
    %309 = vmatpush1.msra.mxu0 %v308
    %310 = vmatprep.subr.mxu0 0.0
    %v311 = vand.u32 %v37, 4294901760
    %v312 = vsub.f32 %v37, %v311
    %313 = vmatpush1.msra.mxu0 %v312
    %314 = vmatprep.subr.mxu0 0.0
    %v315 = vand.u32 %v38, 4294901760
    %v316 = vsub.f32 %v38, %v315
    %317 = vmatpush1.msra.mxu0 %v316
    %318 = vmatprep.subr.mxu0 0.0
    %v319 = vand.u32 %v39, 4294901760
    %v320 = vsub.f32 %v39, %v319
    %321 = vmatpush1.msra.mxu0 %v320
    %322 = vmatprep.subr.mxu0 0.0
    %v323 = vand.u32 %v64, 4294901760
    %v324 = vsub.f32 %v64, %v323
    %325 = vmatpush1.msra.mxu0 %v324
    %326 = vmatprep.subr.mxu0 0.0
    %327 = vmatpush1.msra.mxu0 0.0
    %328 = vmatprep.subr.mxu0 0.0
    %329 = vmatpush1.msra.mxu0 0.0
    %330 = vmatprep.subr.mxu0 0.0
    %331 = vmatpush1.msra.mxu0 0.0
    %332 = vmatprep.subr.mxu0 0.0
    %333 = vmatpush1.msra.mxu0 0.0
    %334 = vmatprep.subr.mxu0 0.0
    %335 = vmatpush1.msra.mxu0 0.0
    %336 = vmatprep.subr.mxu0 0.0
    %337 = vmatpush1.msra.mxu0 0.0
    %338 = vmatprep.subr.mxu0 0.0
    %339 = vmatpush1.msra.mxu0 0.0
    %340 = vmatprep.subr.mxu0 0.0
    %341 = vmatpush1.msra.mxu0 0.0
    %342 = vmatprep.subr.mxu0 0.0
    %343 = vmatpush1.msra.mxu0 0.0
    %344 = vmatprep.subr.mxu0 0.0
    %345 = vmatpush1.msra.mxu0 0.0
    %346 = vmatprep.subr.mxu0 0.0
    %347 = vmatpush1.msra.mxu0 0.0
    %348 = vmatprep.subr.mxu0 0.0
    %349 = vmatpush1.msra.mxu0 0.0
    %350 = vmatprep.subr.mxu0 0.0
    %351 = vmatpush1.msra.mxu0 0.0
    %352 = vmatprep.subr.mxu0 0.0
    %353 = vmatpush1.msra.mxu0 0.0
    %354 = vmatprep.subr.mxu0 0.0
    %355 = vmatpush1.msra.mxu0 0.0
    %356 = vmatprep.subr.mxu0 0.0
    %357 = vmatpush1.msra.mxu0 0.0
    %358 = vmatprep.subr.mxu0 0.0
    %359 = vmatpush1.msra.mxu0 0.0
    %360 = vmatprep.subr.mxu0 0.0
    %361 = vmatpush1.msra.mxu0 0.0
    %362 = vmatprep.subr.mxu0 0.0
    %363 = vmatpush1.msra.mxu0 0.0
    %364 = vmatprep.subr.mxu0 0.0
    %365 = vmatpush1.msra.mxu0 0.0
    %366 = vmatprep.subr.mxu0 0.0
    %367 = vmatpush1.msra.mxu0 0.0
    %368 = vmatprep.subr.mxu0 0.0
    %369 = vmatpush1.msra.mxu0 0.0
    %370 = vmatprep.subr.mxu0 0.0
    %371 = vmatpush1.msra.mxu0 0.0
    %372 = vmatprep.subr.mxu0 0.0
    %373 = vmatpush1.msra.mxu0 0.0
    %374 = vmatprep.subr.mxu0 0.0
    %375 = vmatpush1.msra.mxu0 0.0
    %376 = vmatprep.subr.mxu0 0.0
    %377 = vmatpush1.msra.mxu0 0.0
    %378 = vmatprep.subr.mxu0 0.0
    %379 = vmatpush1.msra.mxu0 0.0
    %380 = vmatprep.mubr.f32.mxu0 0.0
    %v381 = vand.u32 %v48, 4294901760
    %v382 = vsub.f32 %v48, %v381
    %383 = vmatmul.mubr.f32.gmra.mrb[0].mxu0 %v382
    %v384 = vpop.f32.mrb[0].mxu0
    %v385 = vadd.f32 %v279, %v384
    %v386 = vpop.f32.mrb[0].mxu0
    %387 = vmatprep.mubr.f32.mxu0 0.0
    %v388 = vand.u32 %v51, 4294901760
    %v389 = vsub.f32 %v51, %v388
    %390 = vmatmul.mubr.f32.gmra.mrb[0].mxu0 %v389
    %v391 = vpop.f32.mrb[0].mxu0
    %v392 = vadd.f32 %v285, %v391
    %v393 = vpop.f32.mrb[0].mxu0
    %394 = vmatprep.mubr.f32.mxu0 0.0
    %v395 = vand.u32 %v54, 4294901760
    %v396 = vsub.f32 %v54, %v395
    %397 = vmatmul.mubr.f32.gmra.mrb[0].mxu0 %v396
    %v398 = vpop.f32.mrb[0].mxu0
    %v399 = vadd.f32 %v291, %v398
    %v400 = vpop.f32.mrb[0].mxu0
    %401 = vmatprep.mubr.f32.mxu0 0.0
    %v402 = vand.u32 %v57, 4294901760
    %v403 = vsub.f32 %v57, %v402
    %404 = vmatmul.mubr.f32.gmra.mrb[0].mxu0 %v403
    %v405 = vpop.f32.mrb[0].mxu0
    %v406 = vadd.f32 %v297, %v405
    %v407 = vpop.f32.mrb[0].mxu0
    %408 = vmatprep.mubr.f32.mxu0 0.0
    %v409 = vand.u32 %v60, 4294901760
    %v410 = vsub.f32 %v60, %v409
    %411 = vmatmul.mubr.f32.gmra.mrb[0].mxu0 %v410
    %v412 = vpop.f32.mrb[0].mxu0
    %v413 = vadd.f32 %v303, %v412
    %v414 = vpop.f32.mrb[0].mxu0
    %415 = vdwg.mxu0
    %416 = vmatprep.subr.mxu0 0.0
    %v417 = vand.u32 %v36, 4294901760
    %418 = vmatpush1.msra.mxu0 %v417
    %419 = vmatprep.subr.mxu0 0.0
    %v420 = vand.u32 %v37, 4294901760
    %421 = vmatpush1.msra.mxu0 %v420
    %422 = vmatprep.subr.mxu0 0.0
    %v423 = vand.u32 %v38, 4294901760
    %424 = vmatpush1.msra.mxu0 %v423
    %425 = vmatprep.subr.mxu0 0.0
    %v426 = vand.u32 %v39, 4294901760
    %427 = vmatpush1.msra.mxu0 %v426
    %428 = vmatprep.subr.mxu0 0.0
    %v429 = vand.u32 %v64, 4294901760
    %430 = vmatpush1.msra.mxu0 %v429
    %431 = vmatprep.subr.mxu0 0.0
    %432 = vmatpush1.msra.mxu0 0.0
    %433 = vmatprep.subr.mxu0 0.0
    %434 = vmatpush1.msra.mxu0 0.0
    %435 = vmatprep.subr.mxu0 0.0
    %436 = vmatpush1.msra.mxu0 0.0
    %437 = vmatprep.subr.mxu0 0.0
    %438 = vmatpush1.msra.mxu0 0.0
    %439 = vmatprep.subr.mxu0 0.0
    %440 = vmatpush1.msra.mxu0 0.0
    %441 = vmatprep.subr.mxu0 0.0
    %442 = vmatpush1.msra.mxu0 0.0
    %443 = vmatprep.subr.mxu0 0.0
    %444 = vmatpush1.msra.mxu0 0.0
    %445 = vmatprep.subr.mxu0 0.0
    %446 = vmatpush1.msra.mxu0 0.0
    %447 = vmatprep.subr.mxu0 0.0
    %448 = vmatpush1.msra.mxu0 0.0
    %449 = vmatprep.subr.mxu0 0.0
    %450 = vmatpush1.msra.mxu0 0.0
    %451 = vmatprep.subr.mxu0 0.0
    %452 = vmatpush1.msra.mxu0 0.0
    %453 = vmatprep.subr.mxu0 0.0
    %454 = vmatpush1.msra.mxu0 0.0
    %455 = vmatprep.subr.mxu0 0.0
    %456 = vmatpush1.msra.mxu0 0.0
    %457 = vmatprep.subr.mxu0 0.0
    %458 = vmatpush1.msra.mxu0 0.0
    %459 = vmatprep.subr.mxu0 0.0
    %460 = vmatpush1.msra.mxu0 0.0
    %461 = vmatprep.subr.mxu0 0.0
    %462 = vmatpush1.msra.mxu0 0.0
    %463 = vmatprep.subr.mxu0 0.0
    %464 = vmatpush1.msra.mxu0 0.0
    %465 = vmatprep.subr.mxu0 0.0
    %466 = vmatpush1.msra.mxu0 0.0
    %467 = vmatprep.subr.mxu0 0.0
    %468 = vmatpush1.msra.mxu0 0.0
    %469 = vmatprep.subr.mxu0 0.0
    %470 = vmatpush1.msra.mxu0 0.0
    %471 = vmatprep.subr.mxu0 0.0
    %472 = vmatpush1.msra.mxu0 0.0
    %473 = vmatprep.subr.mxu0 0.0
    %474 = vmatpush1.msra.mxu0 0.0
    %475 = vmatprep.subr.mxu0 0.0
    %476 = vmatpush1.msra.mxu0 0.0
    %477 = vmatprep.subr.mxu0 0.0
    %478 = vmatpush1.msra.mxu0 0.0
    %479 = vmatprep.subr.mxu0 0.0
    %480 = vmatpush1.msra.mxu0 0.0
    %481 = vmatprep.subr.mxu0 0.0
    %482 = vmatpush1.msra.mxu0 0.0
    %483 = vmatprep.subr.mxu0 0.0
    %484 = vmatpush1.msra.mxu0 0.0
    %485 = vmatprep.mubr.f32.mxu0 0.0
    %v486 = vand.u32 %v48, 4294901760
    %v487 = vsub.f32 %v48, %v486
    %v488 = vand.u32 %v487, 4294901760
    %489 = vmatmul.mubr.f32.gmra.mrb[0].mxu0 %v488
    %v490 = vpop.f32.mrb[0].mxu0
    %v491 = vadd.f32 %v385, %v490
    %v492 = vpop.f32.mrb[0].mxu0
    %493 = vmatprep.mubr.f32.mxu0 0.0
    %v494 = vand.u32 %v51, 4294901760
    %v495 = vsub.f32 %v51, %v494
    %v496 = vand.u32 %v495, 4294901760
    %497 = vmatmul.mubr.f32.gmra.mrb[0].mxu0 %v496
    %v498 = vpop.f32.mrb[0].mxu0
    %v499 = vadd.f32 %v392, %v498
    %v500 = vpop.f32.mrb[0].mxu0
    %501 = vmatprep.mubr.f32.mxu0 0.0
    %v502 = vand.u32 %v54, 4294901760
    %v503 = vsub.f32 %v54, %v502
    %v504 = vand.u32 %v503, 4294901760
    %505 = vmatmul.mubr.f32.gmra.mrb[0].mxu0 %v504
    %v506 = vpop.f32.mrb[0].mxu0
    %v507 = vadd.f32 %v399, %v506
    %v508 = vpop.f32.mrb[0].mxu0
    %509 = vmatprep.mubr.f32.mxu0 0.0
    %v510 = vand.u32 %v57, 4294901760
    %v511 = vsub.f32 %v57, %v510
    %v512 = vand.u32 %v511, 4294901760
    %513 = vmatmul.mubr.f32.gmra.mrb[0].mxu0 %v512
    %v514 = vpop.f32.mrb[0].mxu0
    %v515 = vadd.f32 %v406, %v514
    %v516 = vpop.f32.mrb[0].mxu0
    %517 = vmatprep.mubr.f32.mxu0 0.0
    %v518 = vand.u32 %v60, 4294901760
    %v519 = vsub.f32 %v60, %v518
    %v520 = vand.u32 %v519, 4294901760
    %521 = vmatmul.mubr.f32.gmra.mrb[0].mxu0 %v520
    %v522 = vpop.f32.mrb[0].mxu0
    %v523 = vadd.f32 %v413, %v522
    %v524 = vpop.f32.mrb[0].mxu0
    %525 = vdwg.mxu0
    %526 = vmatprep.subr.mxu0 0.0
    %v527 = vand.u32 %v36, 4294901760
    %v528 = vsub.f32 %v36, %v527
    %v529 = vand.u32 %v528, 4294901760
    %530 = vmatpush1.msra.mxu0 %v529
    %531 = vmatprep.subr.mxu0 0.0
    %v532 = vand.u32 %v37, 4294901760
    %v533 = vsub.f32 %v37, %v532
    %v534 = vand.u32 %v533, 4294901760
    %535 = vmatpush1.msra.mxu0 %v534
    %536 = vmatprep.subr.mxu0 0.0
    %v537 = vand.u32 %v38, 4294901760
    %v538 = vsub.f32 %v38, %v537
    %v539 = vand.u32 %v538, 4294901760
    %540 = vmatpush1.msra.mxu0 %v539
    %541 = vmatprep.subr.mxu0 0.0
    %v542 = vand.u32 %v39, 4294901760
    %v543 = vsub.f32 %v39, %v542
    %v544 = vand.u32 %v543, 4294901760
    %545 = vmatpush1.msra.mxu0 %v544
    %546 = vmatprep.subr.mxu0 0.0
    %v547 = vand.u32 %v64, 4294901760
    %v548 = vsub.f32 %v64, %v547
    %v549 = vand.u32 %v548, 4294901760
    %550 = vmatpush1.msra.mxu0 %v549
    %551 = vmatprep.subr.mxu0 0.0
    %552 = vmatpush1.msra.mxu0 0.0
    %553 = vmatprep.subr.mxu0 0.0
    %554 = vmatpush1.msra.mxu0 0.0
    %555 = vmatprep.subr.mxu0 0.0
    %556 = vmatpush1.msra.mxu0 0.0
    %557 = vmatprep.subr.mxu0 0.0
    %558 = vmatpush1.msra.mxu0 0.0
    %559 = vmatprep.subr.mxu0 0.0
    %560 = vmatpush1.msra.mxu0 0.0
    %561 = vmatprep.subr.mxu0 0.0
    %562 = vmatpush1.msra.mxu0 0.0
    %563 = vmatprep.subr.mxu0 0.0
    %564 = vmatpush1.msra.mxu0 0.0
    %565 = vmatprep.subr.mxu0 0.0
    %566 = vmatpush1.msra.mxu0 0.0
    %567 = vmatprep.subr.mxu0 0.0
    %568 = vmatpush1.msra.mxu0 0.0
    %569 = vmatprep.subr.mxu0 0.0
    %570 = vmatpush1.msra.mxu0 0.0
    %571 = vmatprep.subr.mxu0 0.0
    %572 = vmatpush1.msra.mxu0 0.0
    %573 = vmatprep.subr.mxu0 0.0
    %574 = vmatpush1.msra.mxu0 0.0
    %575 = vmatprep.subr.mxu0 0.0
    %576 = vmatpush1.msra.mxu0 0.0
    %577 = vmatprep.subr.mxu0 0.0
    %578 = vmatpush1.msra.mxu0 0.0
    %579 = vmatprep.subr.mxu0 0.0
    %580 = vmatpush1.msra.mxu0 0.0
    %581 = vmatprep.subr.mxu0 0.0
    %582 = vmatpush1.msra.mxu0 0.0
    %583 = vmatprep.subr.mxu0 0.0
    %584 = vmatpush1.msra.mxu0 0.0
    %585 = vmatprep.subr.mxu0 0.0
    %586 = vmatpush1.msra.mxu0 0.0
    %587 = vmatprep.subr.mxu0 0.0
    %588 = vmatpush1.msra.mxu0 0.0
    %589 = vmatprep.subr.mxu0 0.0
    %590 = vmatpush1.msra.mxu0 0.0
    %591 = vmatprep.subr.mxu0 0.0
    %592 = vmatpush1.msra.mxu0 0.0
    %593 = vmatprep.subr.mxu0 0.0
    %594 = vmatpush1.msra.mxu0 0.0
    %595 = vmatprep.subr.mxu0 0.0
    %596 = vmatpush1.msra.mxu0 0.0
    %597 = vmatprep.subr.mxu0 0.0
    %598 = vmatpush1.msra.mxu0 0.0
    %599 = vmatprep.subr.mxu0 0.0
    %600 = vmatpush1.msra.mxu0 0.0
    %601 = vmatprep.subr.mxu0 0.0
    %602 = vmatpush1.msra.mxu0 0.0
    %603 = vmatprep.subr.mxu0 0.0
    %604 = vmatpush1.msra.mxu0 0.0
    %605 = vmatprep.mubr.f32.mxu0 0.0
    %v606 = vand.u32 %v48, 4294901760
    %607 = vmatmul.mubr.f32.gmra.mrb[0].mxu0 %v606
    %v608 = vpop.f32.mrb[0].mxu0
    %v609 = vadd.f32 %v491, %v608
    %v610 = vpop.f32.mrb[0].mxu0
    %611 = vmatprep.mubr.f32.mxu0 0.0
    %v612 = vand.u32 %v51, 4294901760
    %613 = vmatmul.mubr.f32.gmra.mrb[0].mxu0 %v612
    %v614 = vpop.f32.mrb[0].mxu0
    %v615 = vadd.f32 %v499, %v614
    %v616 = vpop.f32.mrb[0].mxu0
    %617 = vmatprep.mubr.f32.mxu0 0.0
    %v618 = vand.u32 %v54, 4294901760
    %619 = vmatmul.mubr.f32.gmra.mrb[0].mxu0 %v618
    %v620 = vpop.f32.mrb[0].mxu0
    %v621 = vadd.f32 %v507, %v620
    %v622 = vpop.f32.mrb[0].mxu0
    %623 = vmatprep.mubr.f32.mxu0 0.0
    %v624 = vand.u32 %v57, 4294901760
    %625 = vmatmul.mubr.f32.gmra.mrb[0].mxu0 %v624
    %v626 = vpop.f32.mrb[0].mxu0
    %v627 = vadd.f32 %v515, %v626
    %v628 = vpop.f32.mrb[0].mxu0
    %629 = vmatprep.mubr.f32.mxu0 0.0
    %v630 = vand.u32 %v60, 4294901760
    %631 = vmatmul.mubr.f32.gmra.mrb[0].mxu0 %v630
    %v632 = vpop.f32.mrb[0].mxu0
    %v633 = vadd.f32 %v523, %v632
    %v634 = vpop.f32.mrb[0].mxu0
    %635 = vdwg.mxu0
    %636 = vmatprep.subr.mxu0 0.0
    %v637 = vand.u32 %v36, 4294901760
    %638 = vmatpush1.msra.mxu0 %v637
    %639 = vmatprep.subr.mxu0 0.0
    %v640 = vand.u32 %v37, 4294901760
    %641 = vmatpush1.msra.mxu0 %v640
    %642 = vmatprep.subr.mxu0 0.0
    %v643 = vand.u32 %v38, 4294901760
    %644 = vmatpush1.msra.mxu0 %v643
    %645 = vmatprep.subr.mxu0 0.0
    %v646 = vand.u32 %v39, 4294901760
    %647 = vmatpush1.msra.mxu0 %v646
    %648 = vmatprep.subr.mxu0 0.0
    %v649 = vand.u32 %v64, 4294901760
    %650 = vmatpush1.msra.mxu0 %v649
    %651 = vmatprep.subr.mxu0 0.0
    %652 = vmatpush1.msra.mxu0 0.0
    %653 = vmatprep.subr.mxu0 0.0
    %654 = vmatpush1.msra.mxu0 0.0
    %655 = vmatprep.subr.mxu0 0.0
    %656 = vmatpush1.msra.mxu0 0.0
    %657 = vmatprep.subr.mxu0 0.0
    %658 = vmatpush1.msra.mxu0 0.0
    %659 = vmatprep.subr.mxu0 0.0
    %660 = vmatpush1.msra.mxu0 0.0
    %661 = vmatprep.subr.mxu0 0.0
    %662 = vmatpush1.msra.mxu0 0.0
    %663 = vmatprep.subr.mxu0 0.0
    %664 = vmatpush1.msra.mxu0 0.0
    %665 = vmatprep.subr.mxu0 0.0
    %666 = vmatpush1.msra.mxu0 0.0
    %667 = vmatprep.subr.mxu0 0.0
    %668 = vmatpush1.msra.mxu0 0.0
    %669 = vmatprep.subr.mxu0 0.0
    %670 = vmatpush1.msra.mxu0 0.0
    %671 = vmatprep.subr.mxu0 0.0
    %672 = vmatpush1.msra.mxu0 0.0
    %673 = vmatprep.subr.mxu0 0.0
    %674 = vmatpush1.msra.mxu0 0.0
    %675 = vmatprep.subr.mxu0 0.0
    %676 = vmatpush1.msra.mxu0 0.0
    %677 = vmatprep.subr.mxu0 0.0
    %678 = vmatpush1.msra.mxu0 0.0
    %679 = vmatprep.subr.mxu0 0.0
    %680 = vmatpush1.msra.mxu0 0.0
    %681 = vmatprep.subr.mxu0 0.0
    %682 = vmatpush1.msra.mxu0 0.0
    %683 = vmatprep.subr.mxu0 0.0
    %684 = vmatpush1.msra.mxu0 0.0
    %685 = vmatprep.subr.mxu0 0.0
    %686 = vmatpush1.msra.mxu0 0.0
    %687 = vmatprep.subr.mxu0 0.0
    %688 = vmatpush1.msra.mxu0 0.0
    %689 = vmatprep.subr.mxu0 0.0
    %690 = vmatpush1.msra.mxu0 0.0
    %691 = vmatprep.subr.mxu0 0.0
    %692 = vmatpush1.msra.mxu0 0.0
    %693 = vmatprep.subr.mxu0 0.0
    %694 = vmatpush1.msra.mxu0 0.0
    %695 = vmatprep.subr.mxu0 0.0
    %696 = vmatpush1.msra.mxu0 0.0
    %697 = vmatprep.subr.mxu0 0.0
    %698 = vmatpush1.msra.mxu0 0.0
    %699 = vmatprep.subr.mxu0 0.0
    %700 = vmatpush1.msra.mxu0 0.0
    %701 = vmatprep.subr.mxu0 0.0
    %702 = vmatpush1.msra.mxu0 0.0
    %703 = vmatprep.subr.mxu0 0.0
    %704 = vmatpush1.msra.mxu0 0.0
    %705 = vmatprep.mubr.f32.mxu0 0.0
    %v706 = vand.u32 %v48, 4294901760
    %707 = vmatmul.mubr.f32.gmra.mrb[0].mxu0 %v706
    %v708 = vpop.f32.mrb[0].mxu0
    %v709 = vadd.f32 %v609, %v708
    %v710 = vpop.f32.mrb[0].mxu0
    %711 = vmatprep.mubr.f32.mxu0 0.0
    %v712 = vand.u32 %v51, 4294901760
    %713 = vmatmul.mubr.f32.gmra.mrb[0].mxu0 %v712
    %v714 = vpop.f32.mrb[0].mxu0
    %v715 = vadd.f32 %v615, %v714
    %v716 = vpop.f32.mrb[0].mxu0
    %717 = vmatprep.mubr.f32.mxu0 0.0
    %v718 = vand.u32 %v54, 4294901760
    %719 = vmatmul.mubr.f32.gmra.mrb[0].mxu0 %v718
    %v720 = vpop.f32.mrb[0].mxu0
    %v721 = vadd.f32 %v621, %v720
    %v722 = vpop.f32.mrb[0].mxu0
    %723 = vmatprep.mubr.f32.mxu0 0.0
    %v724 = vand.u32 %v57, 4294901760
    %725 = vmatmul.mubr.f32.gmra.mrb[0].mxu0 %v724
    %v726 = vpop.f32.mrb[0].mxu0
    %v727 = vadd.f32 %v627, %v726
    %v728 = vpop.f32.mrb[0].mxu0
    %729 = vmatprep.mubr.f32.mxu0 0.0
    %v730 = vand.u32 %v60, 4294901760
    %731 = vmatmul.mubr.f32.gmra.mrb[0].mxu0 %v730
    %v732 = vpop.f32.mrb[0].mxu0
    %v733 = vadd.f32 %v633, %v732
    %v734 = vpop.f32.mrb[0].mxu0
    %735 = vdwg.mxu0
    %v736 = vlaneseq
    %v737 = vshrl.u32 %v736, 7
    %v738 = vsub.s32 2, %v737
    %v739 = vrot.slane %v40, %v738
    %v741 = vsel %vm46, %v31, 0
    %v744 = vsel %vm46, %v32, 0
    %v747 = vsel %vm46, %v33, 0
    %v750 = vsel %vm46, %v34, 0
    %v753 = vsel %vm46, %v35, 0
    %v756 = vsel %vm62, %v733, 0
    %758 = vmatprep.subr.mxu0 0.0
    %v759 = vand.u32 %v709, 4294901760
    %760 = vmatpush1.msra.mxu0 %v759
    %761 = vmatprep.subr.mxu0 0.0
    %v762 = vand.u32 %v715, 4294901760
    %763 = vmatpush1.msra.mxu0 %v762
    %764 = vmatprep.subr.mxu0 0.0
    %v765 = vand.u32 %v721, 4294901760
    %766 = vmatpush1.msra.mxu0 %v765
    %767 = vmatprep.subr.mxu0 0.0
    %v768 = vand.u32 %v727, 4294901760
    %769 = vmatpush1.msra.mxu0 %v768
    %770 = vmatprep.subr.mxu0 0.0
    %v771 = vand.u32 %v756, 4294901760
    %772 = vmatpush1.msra.mxu0 %v771
    %773 = vmatprep.subr.mxu0 0.0
    %774 = vmatpush1.msra.mxu0 0.0
    %775 = vmatprep.subr.mxu0 0.0
    %776 = vmatpush1.msra.mxu0 0.0
    %777 = vmatprep.subr.mxu0 0.0
    %778 = vmatpush1.msra.mxu0 0.0
    %779 = vmatprep.subr.mxu0 0.0
    %780 = vmatpush1.msra.mxu0 0.0
    %781 = vmatprep.subr.mxu0 0.0
    %782 = vmatpush1.msra.mxu0 0.0
    %783 = vmatprep.subr.mxu0 0.0
    %784 = vmatpush1.msra.mxu0 0.0
    %785 = vmatprep.subr.mxu0 0.0
    %786 = vmatpush1.msra.mxu0 0.0
    %787 = vmatprep.subr.mxu0 0.0
    %788 = vmatpush1.msra.mxu0 0.0
    %789 = vmatprep.subr.mxu0 0.0
    %790 = vmatpush1.msra.mxu0 0.0
    %791 = vmatprep.subr.mxu0 0.0
    %792 = vmatpush1.msra.mxu0 0.0
    %793 = vmatprep.subr.mxu0 0.0
    %794 = vmatpush1.msra.mxu0 0.0
    %795 = vmatprep.subr.mxu0 0.0
    %796 = vmatpush1.msra.mxu0 0.0
    %797 = vmatprep.subr.mxu0 0.0
    %798 = vmatpush1.msra.mxu0 0.0
    %799 = vmatprep.subr.mxu0 0.0
    %800 = vmatpush1.msra.mxu0 0.0
    %801 = vmatprep.subr.mxu0 0.0
    %802 = vmatpush1.msra.mxu0 0.0
    %803 = vmatprep.subr.mxu0 0.0
    %804 = vmatpush1.msra.mxu0 0.0
    %805 = vmatprep.subr.mxu0 0.0
    %806 = vmatpush1.msra.mxu0 0.0
    %807 = vmatprep.subr.mxu0 0.0
    %808 = vmatpush1.msra.mxu0 0.0
    %809 = vmatprep.subr.mxu0 0.0
    %810 = vmatpush1.msra.mxu0 0.0
    %811 = vmatprep.subr.mxu0 0.0
    %812 = vmatpush1.msra.mxu0 0.0
    %813 = vmatprep.subr.mxu0 0.0
    %814 = vmatpush1.msra.mxu0 0.0
    %815 = vmatprep.subr.mxu0 0.0
    %816 = vmatpush1.msra.mxu0 0.0
    %817 = vmatprep.subr.mxu0 0.0
    %818 = vmatpush1.msra.mxu0 0.0
    %819 = vmatprep.subr.mxu0 0.0
    %820 = vmatpush1.msra.mxu0 0.0
    %821 = vmatprep.subr.mxu0 0.0
    %822 = vmatpush1.msra.mxu0 0.0
    %823 = vmatprep.subr.mxu0 0.0
    %824 = vmatpush1.msra.mxu0 0.0
    %825 = vmatprep.subr.mxu0 0.0
    %826 = vmatpush1.msra.mxu0 0.0
    %827 = vmatprep.mubr.f32.mxu0 0.0
    %v828 = vand.u32 %v741, 4294901760
    %v829 = vsub.f32 %v741, %v828
    %v830 = vand.u32 %v829, 4294901760
    %v831 = vsub.f32 %v829, %v830
    %v832 = vand.u32 %v831, 4294901760
    %833 = vmatmul.mubr.f32.gmra.mrb[0].mxu0 %v832
    %v834 = vpop.f32.mrb[0].mxu0
    %v835 = vadd.f32 %v739, %v834
    %v836 = vpop.f32.mrb[0].mxu0
    %837 = vmatprep.mubr.f32.mxu0 0.0
    %v838 = vand.u32 %v744, 4294901760
    %v839 = vsub.f32 %v744, %v838
    %v840 = vand.u32 %v839, 4294901760
    %v841 = vsub.f32 %v839, %v840
    %v842 = vand.u32 %v841, 4294901760
    %843 = vmatmul.mubr.f32.gmra.mrb[0].mxu0 %v842
    %v844 = vpop.f32.mrb[0].mxu0
    %v845 = vadd.f32 %v739, %v844
    %v846 = vpop.f32.mrb[0].mxu0
    %847 = vmatprep.mubr.f32.mxu0 0.0
    %v848 = vand.u32 %v747, 4294901760
    %v849 = vsub.f32 %v747, %v848
    %v850 = vand.u32 %v849, 4294901760
    %v851 = vsub.f32 %v849, %v850
    %v852 = vand.u32 %v851, 4294901760
    %853 = vmatmul.mubr.f32.gmra.mrb[0].mxu0 %v852
    %v854 = vpop.f32.mrb[0].mxu0
    %v855 = vadd.f32 %v739, %v854
    %v856 = vpop.f32.mrb[0].mxu0
    %857 = vmatprep.mubr.f32.mxu0 0.0
    %v858 = vand.u32 %v750, 4294901760
    %v859 = vsub.f32 %v750, %v858
    %v860 = vand.u32 %v859, 4294901760
    %v861 = vsub.f32 %v859, %v860
    %v862 = vand.u32 %v861, 4294901760
    %863 = vmatmul.mubr.f32.gmra.mrb[0].mxu0 %v862
    %v864 = vpop.f32.mrb[0].mxu0
    %v865 = vadd.f32 %v739, %v864
    %v866 = vpop.f32.mrb[0].mxu0
    %867 = vmatprep.mubr.f32.mxu0 0.0
    %v868 = vand.u32 %v753, 4294901760
    %v869 = vsub.f32 %v753, %v868
    %v870 = vand.u32 %v869, 4294901760
    %v871 = vsub.f32 %v869, %v870
    %v872 = vand.u32 %v871, 4294901760
    %873 = vmatmul.mubr.f32.gmra.mrb[0].mxu0 %v872
    %v874 = vpop.f32.mrb[0].mxu0
    %v875 = vadd.f32 %v739, %v874
    %v876 = vpop.f32.mrb[0].mxu0
    %877 = vdwg.mxu0
    %878 = vmatprep.subr.mxu0 0.0
    %v879 = vand.u32 %v709, 4294901760
    %v880 = vsub.f32 %v709, %v879
    %v881 = vand.u32 %v880, 4294901760
    %v882 = vsub.f32 %v880, %v881
    %v883 = vand.u32 %v882, 4294901760
    %884 = vmatpush1.msra.mxu0 %v883
    %885 = vmatprep.subr.mxu0 0.0
    %v886 = vand.u32 %v715, 4294901760
    %v887 = vsub.f32 %v715, %v886
    %v888 = vand.u32 %v887, 4294901760
    %v889 = vsub.f32 %v887, %v888
    %v890 = vand.u32 %v889, 4294901760
    %891 = vmatpush1.msra.mxu0 %v890
    %892 = vmatprep.subr.mxu0 0.0
    %v893 = vand.u32 %v721, 4294901760
    %v894 = vsub.f32 %v721, %v893
    %v895 = vand.u32 %v894, 4294901760
    %v896 = vsub.f32 %v894, %v895
    %v897 = vand.u32 %v896, 4294901760
    %898 = vmatpush1.msra.mxu0 %v897
    %899 = vmatprep.subr.mxu0 0.0
    %v900 = vand.u32 %v727, 4294901760
    %v901 = vsub.f32 %v727, %v900
    %v902 = vand.u32 %v901, 4294901760
    %v903 = vsub.f32 %v901, %v902
    %v904 = vand.u32 %v903, 4294901760
    %905 = vmatpush1.msra.mxu0 %v904
    %906 = vmatprep.subr.mxu0 0.0
    %v907 = vand.u32 %v756, 4294901760
    %v908 = vsub.f32 %v756, %v907
    %v909 = vand.u32 %v908, 4294901760
    %v910 = vsub.f32 %v908, %v909
    %v911 = vand.u32 %v910, 4294901760
    %912 = vmatpush1.msra.mxu0 %v911
    %913 = vmatprep.subr.mxu0 0.0
    %914 = vmatpush1.msra.mxu0 0.0
    %915 = vmatprep.subr.mxu0 0.0
    %916 = vmatpush1.msra.mxu0 0.0
    %917 = vmatprep.subr.mxu0 0.0
    %918 = vmatpush1.msra.mxu0 0.0
    %919 = vmatprep.subr.mxu0 0.0
    %920 = vmatpush1.msra.mxu0 0.0
    %921 = vmatprep.subr.mxu0 0.0
    %922 = vmatpush1.msra.mxu0 0.0
    %923 = vmatprep.subr.mxu0 0.0
    %924 = vmatpush1.msra.mxu0 0.0
    %925 = vmatprep.subr.mxu0 0.0
    %926 = vmatpush1.msra.mxu0 0.0
    %927 = vmatprep.subr.mxu0 0.0
    %928 = vmatpush1.msra.mxu0 0.0
    %929 = vmatprep.subr.mxu0 0.0
    %930 = vmatpush1.msra.mxu0 0.0
    %931 = vmatprep.subr.mxu0 0.0
    %932 = vmatpush1.msra.mxu0 0.0
    %933 = vmatprep.subr.mxu0 0.0
    %934 = vmatpush1.msra.mxu0 0.0
    %935 = vmatprep.subr.mxu0 0.0
    %936 = vmatpush1.msra.mxu0 0.0
    %937 = vmatprep.subr.mxu0 0.0
    %938 = vmatpush1.msra.mxu0 0.0
    %939 = vmatprep.subr.mxu0 0.0
    %940 = vmatpush1.msra.mxu0 0.0
    %941 = vmatprep.subr.mxu0 0.0
    %942 = vmatpush1.msra.mxu0 0.0
    %943 = vmatprep.subr.mxu0 0.0
    %944 = vmatpush1.msra.mxu0 0.0
    %945 = vmatprep.subr.mxu0 0.0
    %946 = vmatpush1.msra.mxu0 0.0
    %947 = vmatprep.subr.mxu0 0.0
    %948 = vmatpush1.msra.mxu0 0.0
    %949 = vmatprep.subr.mxu0 0.0
    %950 = vmatpush1.msra.mxu0 0.0
    %951 = vmatprep.subr.mxu0 0.0
    %952 = vmatpush1.msra.mxu0 0.0
    %953 = vmatprep.subr.mxu0 0.0
    %954 = vmatpush1.msra.mxu0 0.0
    %955 = vmatprep.subr.mxu0 0.0
    %956 = vmatpush1.msra.mxu0 0.0
    %957 = vmatprep.subr.mxu0 0.0
    %958 = vmatpush1.msra.mxu0 0.0
    %959 = vmatprep.subr.mxu0 0.0
    %960 = vmatpush1.msra.mxu0 0.0
    %961 = vmatprep.subr.mxu0 0.0
    %962 = vmatpush1.msra.mxu0 0.0
    %963 = vmatprep.subr.mxu0 0.0
    %964 = vmatpush1.msra.mxu0 0.0
    %965 = vmatprep.subr.mxu0 0.0
    %966 = vmatpush1.msra.mxu0 0.0
    %967 = vmatprep.mubr.f32.mxu0 0.0
    %v968 = vand.u32 %v741, 4294901760
    %969 = vmatmul.mubr.f32.gmra.mrb[0].mxu0 %v968
    %v970 = vpop.f32.mrb[0].mxu0
    %v971 = vadd.f32 %v835, %v970
    %v972 = vpop.f32.mrb[0].mxu0
    %973 = vmatprep.mubr.f32.mxu0 0.0
    %v974 = vand.u32 %v744, 4294901760
    %975 = vmatmul.mubr.f32.gmra.mrb[0].mxu0 %v974
    %v976 = vpop.f32.mrb[0].mxu0
    %v977 = vadd.f32 %v845, %v976
    %v978 = vpop.f32.mrb[0].mxu0
    %979 = vmatprep.mubr.f32.mxu0 0.0
    %v980 = vand.u32 %v747, 4294901760
    %981 = vmatmul.mubr.f32.gmra.mrb[0].mxu0 %v980
    %v982 = vpop.f32.mrb[0].mxu0
    %v983 = vadd.f32 %v855, %v982
    %v984 = vpop.f32.mrb[0].mxu0
    %985 = vmatprep.mubr.f32.mxu0 0.0
    %v986 = vand.u32 %v750, 4294901760
    %987 = vmatmul.mubr.f32.gmra.mrb[0].mxu0 %v986
    %v988 = vpop.f32.mrb[0].mxu0
    %v989 = vadd.f32 %v865, %v988
    %v990 = vpop.f32.mrb[0].mxu0
    %991 = vmatprep.mubr.f32.mxu0 0.0
    %v992 = vand.u32 %v753, 4294901760
    %993 = vmatmul.mubr.f32.gmra.mrb[0].mxu0 %v992
    %v994 = vpop.f32.mrb[0].mxu0
    %v995 = vadd.f32 %v875, %v994
    %v996 = vpop.f32.mrb[0].mxu0
    %997 = vdwg.mxu0
    %998 = vmatprep.subr.mxu0 0.0
    %v999 = vand.u32 %v709, 4294901760
    %v1000 = vsub.f32 %v709, %v999
    %1001 = vmatpush1.msra.mxu0 %v1000
    %1002 = vmatprep.subr.mxu0 0.0
    %v1003 = vand.u32 %v715, 4294901760
    %v1004 = vsub.f32 %v715, %v1003
    %1005 = vmatpush1.msra.mxu0 %v1004
    %1006 = vmatprep.subr.mxu0 0.0
    %v1007 = vand.u32 %v721, 4294901760
    %v1008 = vsub.f32 %v721, %v1007
    %1009 = vmatpush1.msra.mxu0 %v1008
    %1010 = vmatprep.subr.mxu0 0.0
    %v1011 = vand.u32 %v727, 4294901760
    %v1012 = vsub.f32 %v727, %v1011
    %1013 = vmatpush1.msra.mxu0 %v1012
    %1014 = vmatprep.subr.mxu0 0.0
    %v1015 = vand.u32 %v756, 4294901760
    %v1016 = vsub.f32 %v756, %v1015
    %1017 = vmatpush1.msra.mxu0 %v1016
    %1018 = vmatprep.subr.mxu0 0.0
    %1019 = vmatpush1.msra.mxu0 0.0
    %1020 = vmatprep.subr.mxu0 0.0
    %1021 = vmatpush1.msra.mxu0 0.0
    %1022 = vmatprep.subr.mxu0 0.0
    %1023 = vmatpush1.msra.mxu0 0.0
    %1024 = vmatprep.subr.mxu0 0.0
    %1025 = vmatpush1.msra.mxu0 0.0
    %1026 = vmatprep.subr.mxu0 0.0
    %1027 = vmatpush1.msra.mxu0 0.0
    %1028 = vmatprep.subr.mxu0 0.0
    %1029 = vmatpush1.msra.mxu0 0.0
    %1030 = vmatprep.subr.mxu0 0.0
    %1031 = vmatpush1.msra.mxu0 0.0
    %1032 = vmatprep.subr.mxu0 0.0
    %1033 = vmatpush1.msra.mxu0 0.0
    %1034 = vmatprep.subr.mxu0 0.0
    %1035 = vmatpush1.msra.mxu0 0.0
    %1036 = vmatprep.subr.mxu0 0.0
    %1037 = vmatpush1.msra.mxu0 0.0
    %1038 = vmatprep.subr.mxu0 0.0
    %1039 = vmatpush1.msra.mxu0 0.0
    %1040 = vmatprep.subr.mxu0 0.0
    %1041 = vmatpush1.msra.mxu0 0.0
    %1042 = vmatprep.subr.mxu0 0.0
    %1043 = vmatpush1.msra.mxu0 0.0
    %1044 = vmatprep.subr.mxu0 0.0
    %1045 = vmatpush1.msra.mxu0 0.0
    %1046 = vmatprep.subr.mxu0 0.0
    %1047 = vmatpush1.msra.mxu0 0.0
    %1048 = vmatprep.subr.mxu0 0.0
    %1049 = vmatpush1.msra.mxu0 0.0
    %1050 = vmatprep.subr.mxu0 0.0
    %1051 = vmatpush1.msra.mxu0 0.0
    %1052 = vmatprep.subr.mxu0 0.0
    %1053 = vmatpush1.msra.mxu0 0.0
    %1054 = vmatprep.subr.mxu0 0.0
    %1055 = vmatpush1.msra.mxu0 0.0
    %1056 = vmatprep.subr.mxu0 0.0
    %1057 = vmatpush1.msra.mxu0 0.0
    %1058 = vmatprep.subr.mxu0 0.0
    %1059 = vmatpush1.msra.mxu0 0.0
    %1060 = vmatprep.subr.mxu0 0.0
    %1061 = vmatpush1.msra.mxu0 0.0
    %1062 = vmatprep.subr.mxu0 0.0
    %1063 = vmatpush1.msra.mxu0 0.0
    %1064 = vmatprep.subr.mxu0 0.0
    %1065 = vmatpush1.msra.mxu0 0.0
    %1066 = vmatprep.subr.mxu0 0.0
    %1067 = vmatpush1.msra.mxu0 0.0
    %1068 = vmatprep.subr.mxu0 0.0
    %1069 = vmatpush1.msra.mxu0 0.0
    %1070 = vmatprep.subr.mxu0 0.0
    %1071 = vmatpush1.msra.mxu0 0.0
    %1072 = vmatprep.mubr.f32.mxu0 0.0
    %v1073 = vand.u32 %v741, 4294901760
    %v1074 = vsub.f32 %v741, %v1073
    %1075 = vmatmul.mubr.f32.gmra.mrb[0].mxu0 %v1074
    %v1076 = vpop.f32.mrb[0].mxu0
    %v1077 = vadd.f32 %v971, %v1076
    %v1078 = vpop.f32.mrb[0].mxu0
    %1079 = vmatprep.mubr.f32.mxu0 0.0
    %v1080 = vand.u32 %v744, 4294901760
    %v1081 = vsub.f32 %v744, %v1080
    %1082 = vmatmul.mubr.f32.gmra.mrb[0].mxu0 %v1081
    %v1083 = vpop.f32.mrb[0].mxu0
    %v1084 = vadd.f32 %v977, %v1083
    %v1085 = vpop.f32.mrb[0].mxu0
    %1086 = vmatprep.mubr.f32.mxu0 0.0
    %v1087 = vand.u32 %v747, 4294901760
    %v1088 = vsub.f32 %v747, %v1087
    %1089 = vmatmul.mubr.f32.gmra.mrb[0].mxu0 %v1088
    %v1090 = vpop.f32.mrb[0].mxu0
    %v1091 = vadd.f32 %v983, %v1090
    %v1092 = vpop.f32.mrb[0].mxu0
    %1093 = vmatprep.mubr.f32.mxu0 0.0
    %v1094 = vand.u32 %v750, 4294901760
    %v1095 = vsub.f32 %v750, %v1094
    %1096 = vmatmul.mubr.f32.gmra.mrb[0].mxu0 %v1095
    %v1097 = vpop.f32.mrb[0].mxu0
    %v1098 = vadd.f32 %v989, %v1097
    %v1099 = vpop.f32.mrb[0].mxu0
    %1100 = vmatprep.mubr.f32.mxu0 0.0
    %v1101 = vand.u32 %v753, 4294901760
    %v1102 = vsub.f32 %v753, %v1101
    %1103 = vmatmul.mubr.f32.gmra.mrb[0].mxu0 %v1102
    %v1104 = vpop.f32.mrb[0].mxu0
    %v1105 = vadd.f32 %v995, %v1104
    %v1106 = vpop.f32.mrb[0].mxu0
    %1107 = vdwg.mxu0
    %1108 = vmatprep.subr.mxu0 0.0
    %v1109 = vand.u32 %v709, 4294901760
    %1110 = vmatpush1.msra.mxu0 %v1109
    %1111 = vmatprep.subr.mxu0 0.0
    %v1112 = vand.u32 %v715, 4294901760
    %1113 = vmatpush1.msra.mxu0 %v1112
    %1114 = vmatprep.subr.mxu0 0.0
    %v1115 = vand.u32 %v721, 4294901760
    %1116 = vmatpush1.msra.mxu0 %v1115
    %1117 = vmatprep.subr.mxu0 0.0
    %v1118 = vand.u32 %v727, 4294901760
    %1119 = vmatpush1.msra.mxu0 %v1118
    %1120 = vmatprep.subr.mxu0 0.0
    %v1121 = vand.u32 %v756, 4294901760
    %1122 = vmatpush1.msra.mxu0 %v1121
    %1123 = vmatprep.subr.mxu0 0.0
    %1124 = vmatpush1.msra.mxu0 0.0
    %1125 = vmatprep.subr.mxu0 0.0
    %1126 = vmatpush1.msra.mxu0 0.0
    %1127 = vmatprep.subr.mxu0 0.0
    %1128 = vmatpush1.msra.mxu0 0.0
    %1129 = vmatprep.subr.mxu0 0.0
    %1130 = vmatpush1.msra.mxu0 0.0
    %1131 = vmatprep.subr.mxu0 0.0
    %1132 = vmatpush1.msra.mxu0 0.0
    %1133 = vmatprep.subr.mxu0 0.0
    %1134 = vmatpush1.msra.mxu0 0.0
    %1135 = vmatprep.subr.mxu0 0.0
    %1136 = vmatpush1.msra.mxu0 0.0
    %1137 = vmatprep.subr.mxu0 0.0
    %1138 = vmatpush1.msra.mxu0 0.0
    %1139 = vmatprep.subr.mxu0 0.0
    %1140 = vmatpush1.msra.mxu0 0.0
    %1141 = vmatprep.subr.mxu0 0.0
    %1142 = vmatpush1.msra.mxu0 0.0
    %1143 = vmatprep.subr.mxu0 0.0
    %1144 = vmatpush1.msra.mxu0 0.0
    %1145 = vmatprep.subr.mxu0 0.0
    %1146 = vmatpush1.msra.mxu0 0.0
    %1147 = vmatprep.subr.mxu0 0.0
    %1148 = vmatpush1.msra.mxu0 0.0
    %1149 = vmatprep.subr.mxu0 0.0
    %1150 = vmatpush1.msra.mxu0 0.0
    %1151 = vmatprep.subr.mxu0 0.0
    %1152 = vmatpush1.msra.mxu0 0.0
    %1153 = vmatprep.subr.mxu0 0.0
    %1154 = vmatpush1.msra.mxu0 0.0
    %1155 = vmatprep.subr.mxu0 0.0
    %1156 = vmatpush1.msra.mxu0 0.0
    %1157 = vmatprep.subr.mxu0 0.0
    %1158 = vmatpush1.msra.mxu0 0.0
    %1159 = vmatprep.subr.mxu0 0.0
    %1160 = vmatpush1.msra.mxu0 0.0
    %1161 = vmatprep.subr.mxu0 0.0
    %1162 = vmatpush1.msra.mxu0 0.0
    %1163 = vmatprep.subr.mxu0 0.0
    %1164 = vmatpush1.msra.mxu0 0.0
    %1165 = vmatprep.subr.mxu0 0.0
    %1166 = vmatpush1.msra.mxu0 0.0
    %1167 = vmatprep.subr.mxu0 0.0
    %1168 = vmatpush1.msra.mxu0 0.0
    %1169 = vmatprep.subr.mxu0 0.0
    %1170 = vmatpush1.msra.mxu0 0.0
    %1171 = vmatprep.subr.mxu0 0.0
    %1172 = vmatpush1.msra.mxu0 0.0
    %1173 = vmatprep.subr.mxu0 0.0
    %1174 = vmatpush1.msra.mxu0 0.0
    %1175 = vmatprep.subr.mxu0 0.0
    %1176 = vmatpush1.msra.mxu0 0.0
    %1177 = vmatprep.mubr.f32.mxu0 0.0
    %v1178 = vand.u32 %v741, 4294901760
    %v1179 = vsub.f32 %v741, %v1178
    %v1180 = vand.u32 %v1179, 4294901760
    %1181 = vmatmul.mubr.f32.gmra.mrb[0].mxu0 %v1180
    %v1182 = vpop.f32.mrb[0].mxu0
    %v1183 = vadd.f32 %v1077, %v1182
    %v1184 = vpop.f32.mrb[0].mxu0
    %1185 = vmatprep.mubr.f32.mxu0 0.0
    %v1186 = vand.u32 %v744, 4294901760
    %v1187 = vsub.f32 %v744, %v1186
    %v1188 = vand.u32 %v1187, 4294901760
    %1189 = vmatmul.mubr.f32.gmra.mrb[0].mxu0 %v1188
    %v1190 = vpop.f32.mrb[0].mxu0
    %v1191 = vadd.f32 %v1084, %v1190
    %v1192 = vpop.f32.mrb[0].mxu0
    %1193 = vmatprep.mubr.f32.mxu0 0.0
    %v1194 = vand.u32 %v747, 4294901760
    %v1195 = vsub.f32 %v747, %v1194
    %v1196 = vand.u32 %v1195, 4294901760
    %1197 = vmatmul.mubr.f32.gmra.mrb[0].mxu0 %v1196
    %v1198 = vpop.f32.mrb[0].mxu0
    %v1199 = vadd.f32 %v1091, %v1198
    %v1200 = vpop.f32.mrb[0].mxu0
    %1201 = vmatprep.mubr.f32.mxu0 0.0
    %v1202 = vand.u32 %v750, 4294901760
    %v1203 = vsub.f32 %v750, %v1202
    %v1204 = vand.u32 %v1203, 4294901760
    %1205 = vmatmul.mubr.f32.gmra.mrb[0].mxu0 %v1204
    %v1206 = vpop.f32.mrb[0].mxu0
    %v1207 = vadd.f32 %v1098, %v1206
    %v1208 = vpop.f32.mrb[0].mxu0
    %1209 = vmatprep.mubr.f32.mxu0 0.0
    %v1210 = vand.u32 %v753, 4294901760
    %v1211 = vsub.f32 %v753, %v1210
    %v1212 = vand.u32 %v1211, 4294901760
    %1213 = vmatmul.mubr.f32.gmra.mrb[0].mxu0 %v1212
    %v1214 = vpop.f32.mrb[0].mxu0
    %v1215 = vadd.f32 %v1105, %v1214
    %v1216 = vpop.f32.mrb[0].mxu0
    %1217 = vdwg.mxu0
    %1218 = vmatprep.subr.mxu0 0.0
    %v1219 = vand.u32 %v709, 4294901760
    %v1220 = vsub.f32 %v709, %v1219
    %v1221 = vand.u32 %v1220, 4294901760
    %1222 = vmatpush1.msra.mxu0 %v1221
    %1223 = vmatprep.subr.mxu0 0.0
    %v1224 = vand.u32 %v715, 4294901760
    %v1225 = vsub.f32 %v715, %v1224
    %v1226 = vand.u32 %v1225, 4294901760
    %1227 = vmatpush1.msra.mxu0 %v1226
    %1228 = vmatprep.subr.mxu0 0.0
    %v1229 = vand.u32 %v721, 4294901760
    %v1230 = vsub.f32 %v721, %v1229
    %v1231 = vand.u32 %v1230, 4294901760
    %1232 = vmatpush1.msra.mxu0 %v1231
    %1233 = vmatprep.subr.mxu0 0.0
    %v1234 = vand.u32 %v727, 4294901760
    %v1235 = vsub.f32 %v727, %v1234
    %v1236 = vand.u32 %v1235, 4294901760
    %1237 = vmatpush1.msra.mxu0 %v1236
    %1238 = vmatprep.subr.mxu0 0.0
    %v1239 = vand.u32 %v756, 4294901760
    %v1240 = vsub.f32 %v756, %v1239
    %v1241 = vand.u32 %v1240, 4294901760
    %1242 = vmatpush1.msra.mxu0 %v1241
    %1243 = vmatprep.subr.mxu0 0.0
    %1244 = vmatpush1.msra.mxu0 0.0
    %1245 = vmatprep.subr.mxu0 0.0
    %1246 = vmatpush1.msra.mxu0 0.0
    %1247 = vmatprep.subr.mxu0 0.0
    %1248 = vmatpush1.msra.mxu0 0.0
    %1249 = vmatprep.subr.mxu0 0.0
    %1250 = vmatpush1.msra.mxu0 0.0
    %1251 = vmatprep.subr.mxu0 0.0
    %1252 = vmatpush1.msra.mxu0 0.0
    %1253 = vmatprep.subr.mxu0 0.0
    %1254 = vmatpush1.msra.mxu0 0.0
    %1255 = vmatprep.subr.mxu0 0.0
    %1256 = vmatpush1.msra.mxu0 0.0
    %1257 = vmatprep.subr.mxu0 0.0
    %1258 = vmatpush1.msra.mxu0 0.0
    %1259 = vmatprep.subr.mxu0 0.0
    %1260 = vmatpush1.msra.mxu0 0.0
    %1261 = vmatprep.subr.mxu0 0.0
    %1262 = vmatpush1.msra.mxu0 0.0
    %1263 = vmatprep.subr.mxu0 0.0
    %1264 = vmatpush1.msra.mxu0 0.0
    %1265 = vmatprep.subr.mxu0 0.0
    %1266 = vmatpush1.msra.mxu0 0.0
    %1267 = vmatprep.subr.mxu0 0.0
    %1268 = vmatpush1.msra.mxu0 0.0
    %1269 = vmatprep.subr.mxu0 0.0
    %1270 = vmatpush1.msra.mxu0 0.0
    %1271 = vmatprep.subr.mxu0 0.0
    %1272 = vmatpush1.msra.mxu0 0.0
    %1273 = vmatprep.subr.mxu0 0.0
    %1274 = vmatpush1.msra.mxu0 0.0
    %1275 = vmatprep.subr.mxu0 0.0
    %1276 = vmatpush1.msra.mxu0 0.0
    %1277 = vmatprep.subr.mxu0 0.0
    %1278 = vmatpush1.msra.mxu0 0.0
    %1279 = vmatprep.subr.mxu0 0.0
    %1280 = vmatpush1.msra.mxu0 0.0
    %1281 = vmatprep.subr.mxu0 0.0
    %1282 = vmatpush1.msra.mxu0 0.0
    %1283 = vmatprep.subr.mxu0 0.0
    %1284 = vmatpush1.msra.mxu0 0.0
    %1285 = vmatprep.subr.mxu0 0.0
    %1286 = vmatpush1.msra.mxu0 0.0
    %1287 = vmatprep.subr.mxu0 0.0
    %1288 = vmatpush1.msra.mxu0 0.0
    %1289 = vmatprep.subr.mxu0 0.0
    %1290 = vmatpush1.msra.mxu0 0.0
    %1291 = vmatprep.subr.mxu0 0.0
    %1292 = vmatpush1.msra.mxu0 0.0
    %1293 = vmatprep.subr.mxu0 0.0
    %1294 = vmatpush1.msra.mxu0 0.0
    %1295 = vmatprep.subr.mxu0 0.0
    %1296 = vmatpush1.msra.mxu0 0.0
    %1297 = vmatprep.mubr.f32.mxu0 0.0
    %v1298 = vand.u32 %v741, 4294901760
    %1299 = vmatmul.mubr.f32.gmra.mrb[0].mxu0 %v1298
    %v1300 = vpop.f32.mrb[0].mxu0
    %v1301 = vadd.f32 %v1183, %v1300
    %v1302 = vpop.f32.mrb[0].mxu0
    %1303 = vmatprep.mubr.f32.mxu0 0.0
    %v1304 = vand.u32 %v744, 4294901760
    %1305 = vmatmul.mubr.f32.gmra.mrb[0].mxu0 %v1304
    %v1306 = vpop.f32.mrb[0].mxu0
    %v1307 = vadd.f32 %v1191, %v1306
    %v1308 = vpop.f32.mrb[0].mxu0
    %1309 = vmatprep.mubr.f32.mxu0 0.0
    %v1310 = vand.u32 %v747, 4294901760
    %1311 = vmatmul.mubr.f32.gmra.mrb[0].mxu0 %v1310
    %v1312 = vpop.f32.mrb[0].mxu0
    %v1313 = vadd.f32 %v1199, %v1312
    %v1314 = vpop.f32.mrb[0].mxu0
    %1315 = vmatprep.mubr.f32.mxu0 0.0
    %v1316 = vand.u32 %v750, 4294901760
    %1317 = vmatmul.mubr.f32.gmra.mrb[0].mxu0 %v1316
    %v1318 = vpop.f32.mrb[0].mxu0
    %v1319 = vadd.f32 %v1207, %v1318
    %v1320 = vpop.f32.mrb[0].mxu0
    %1321 = vmatprep.mubr.f32.mxu0 0.0
    %v1322 = vand.u32 %v753, 4294901760
    %1323 = vmatmul.mubr.f32.gmra.mrb[0].mxu0 %v1322
    %v1324 = vpop.f32.mrb[0].mxu0
    %v1325 = vadd.f32 %v1215, %v1324
    %v1326 = vpop.f32.mrb[0].mxu0
    %1327 = vdwg.mxu0
    %1328 = vmatprep.subr.mxu0 0.0
    %v1329 = vand.u32 %v709, 4294901760
    %1330 = vmatpush1.msra.mxu0 %v1329
    %1331 = vmatprep.subr.mxu0 0.0
    %v1332 = vand.u32 %v715, 4294901760
    %1333 = vmatpush1.msra.mxu0 %v1332
    %1334 = vmatprep.subr.mxu0 0.0
    %v1335 = vand.u32 %v721, 4294901760
    %1336 = vmatpush1.msra.mxu0 %v1335
    %1337 = vmatprep.subr.mxu0 0.0
    %v1338 = vand.u32 %v727, 4294901760
    %1339 = vmatpush1.msra.mxu0 %v1338
    %1340 = vmatprep.subr.mxu0 0.0
    %v1341 = vand.u32 %v756, 4294901760
    %1342 = vmatpush1.msra.mxu0 %v1341
    %1343 = vmatprep.subr.mxu0 0.0
    %1344 = vmatpush1.msra.mxu0 0.0
    %1345 = vmatprep.subr.mxu0 0.0
    %1346 = vmatpush1.msra.mxu0 0.0
    %1347 = vmatprep.subr.mxu0 0.0
    %1348 = vmatpush1.msra.mxu0 0.0
    %1349 = vmatprep.subr.mxu0 0.0
    %1350 = vmatpush1.msra.mxu0 0.0
    %1351 = vmatprep.subr.mxu0 0.0
    %1352 = vmatpush1.msra.mxu0 0.0
    %1353 = vmatprep.subr.mxu0 0.0
    %1354 = vmatpush1.msra.mxu0 0.0
    %1355 = vmatprep.subr.mxu0 0.0
    %1356 = vmatpush1.msra.mxu0 0.0
    %1357 = vmatprep.subr.mxu0 0.0
    %1358 = vmatpush1.msra.mxu0 0.0
    %1359 = vmatprep.subr.mxu0 0.0
    %1360 = vmatpush1.msra.mxu0 0.0
    %1361 = vmatprep.subr.mxu0 0.0
    %1362 = vmatpush1.msra.mxu0 0.0
    %1363 = vmatprep.subr.mxu0 0.0
    %1364 = vmatpush1.msra.mxu0 0.0
    %1365 = vmatprep.subr.mxu0 0.0
    %1366 = vmatpush1.msra.mxu0 0.0
    %1367 = vmatprep.subr.mxu0 0.0
    %1368 = vmatpush1.msra.mxu0 0.0
    %1369 = vmatprep.subr.mxu0 0.0
    %1370 = vmatpush1.msra.mxu0 0.0
    %1371 = vmatprep.subr.mxu0 0.0
    %1372 = vmatpush1.msra.mxu0 0.0
    %1373 = vmatprep.subr.mxu0 0.0
    %1374 = vmatpush1.msra.mxu0 0.0
    %1375 = vmatprep.subr.mxu0 0.0
    %1376 = vmatpush1.msra.mxu0 0.0
    %1377 = vmatprep.subr.mxu0 0.0
    %1378 = vmatpush1.msra.mxu0 0.0
    %1379 = vmatprep.subr.mxu0 0.0
    %1380 = vmatpush1.msra.mxu0 0.0
    %1381 = vmatprep.subr.mxu0 0.0
    %1382 = vmatpush1.msra.mxu0 0.0
    %1383 = vmatprep.subr.mxu0 0.0
    %1384 = vmatpush1.msra.mxu0 0.0
    %1385 = vmatprep.subr.mxu0 0.0
    %1386 = vmatpush1.msra.mxu0 0.0
    %1387 = vmatprep.subr.mxu0 0.0
    %1388 = vmatpush1.msra.mxu0 0.0
    %1389 = vmatprep.subr.mxu0 0.0
    %1390 = vmatpush1.msra.mxu0 0.0
    %1391 = vmatprep.subr.mxu0 0.0
    %1392 = vmatpush1.msra.mxu0 0.0
    %1393 = vmatprep.subr.mxu0 0.0
    %1394 = vmatpush1.msra.mxu0 0.0
    %1395 = vmatprep.subr.mxu0 0.0
    %1396 = vmatpush1.msra.mxu0 0.0
    %1397 = vmatprep.mubr.f32.mxu0 0.0
    %v1398 = vand.u32 %v741, 4294901760
    %1399 = vmatmul.mubr.f32.gmra.mrb[0].mxu0 %v1398
    %v1400 = vpop.f32.mrb[0].mxu0
    %v1401 = vadd.f32 %v1301, %v1400
    %v1402 = vpop.f32.mrb[0].mxu0
    %1403 = vmatprep.mubr.f32.mxu0 0.0
    %v1404 = vand.u32 %v744, 4294901760
    %1405 = vmatmul.mubr.f32.gmra.mrb[0].mxu0 %v1404
    %v1406 = vpop.f32.mrb[0].mxu0
    %v1407 = vadd.f32 %v1307, %v1406
    %v1408 = vpop.f32.mrb[0].mxu0
    %1409 = vmatprep.mubr.f32.mxu0 0.0
    %v1410 = vand.u32 %v747, 4294901760
    %1411 = vmatmul.mubr.f32.gmra.mrb[0].mxu0 %v1410
    %v1412 = vpop.f32.mrb[0].mxu0
    %v1413 = vadd.f32 %v1313, %v1412
    %v1414 = vpop.f32.mrb[0].mxu0
    %1415 = vmatprep.mubr.f32.mxu0 0.0
    %v1416 = vand.u32 %v750, 4294901760
    %1417 = vmatmul.mubr.f32.gmra.mrb[0].mxu0 %v1416
    %v1418 = vpop.f32.mrb[0].mxu0
    %v1419 = vadd.f32 %v1319, %v1418
    %v1420 = vpop.f32.mrb[0].mxu0
    %1421 = vmatprep.mubr.f32.mxu0 0.0
    %v1422 = vand.u32 %v753, 4294901760
    %1423 = vmatmul.mubr.f32.gmra.mrb[0].mxu0 %v1422
    %v1424 = vpop.f32.mrb[0].mxu0
    %v1425 = vadd.f32 %v1325, %v1424
    %v1426 = vpop.f32.mrb[0].mxu0
    %1427 = vdwg.mxu0
    %v1428 = vmax.f32 %v1401, 0.0
    %v1429 = vmax.f32 %v1407, 0.0
    %v1430 = vmax.f32 %v1413, 0.0
    %v1431 = vmax.f32 %v1419, 0.0
    %v1432 = vmax.f32 %v1425, 0.0
    %v1433 = vld [vmem:[%s3] sm:$0xff]
    %v1434 = vld [vmem:[%s3 + $0x8] sm:$0x1]
    %v1436 = vsel %vm62, %v1432, 0
    %1438 = vmatprep.subr.mxu0 0.0
    %v1439 = vand.u32 %v1428, 4294901760
    %1440 = vmatpush1.msra.mxu0 %v1439
    %1441 = vmatprep.subr.mxu0 0.0
    %v1442 = vand.u32 %v1429, 4294901760
    %1443 = vmatpush1.msra.mxu0 %v1442
    %1444 = vmatprep.subr.mxu0 0.0
    %v1445 = vand.u32 %v1430, 4294901760
    %1446 = vmatpush1.msra.mxu0 %v1445
    %1447 = vmatprep.subr.mxu0 0.0
    %v1448 = vand.u32 %v1431, 4294901760
    %1449 = vmatpush1.msra.mxu0 %v1448
    %1450 = vmatprep.subr.mxu0 0.0
    %v1451 = vand.u32 %v1436, 4294901760
    %1452 = vmatpush1.msra.mxu0 %v1451
    %1453 = vmatprep.subr.mxu0 0.0
    %1454 = vmatpush1.msra.mxu0 0.0
    %1455 = vmatprep.subr.mxu0 0.0
    %1456 = vmatpush1.msra.mxu0 0.0
    %1457 = vmatprep.subr.mxu0 0.0
    %1458 = vmatpush1.msra.mxu0 0.0
    %1459 = vmatprep.subr.mxu0 0.0
    %1460 = vmatpush1.msra.mxu0 0.0
    %1461 = vmatprep.subr.mxu0 0.0
    %1462 = vmatpush1.msra.mxu0 0.0
    %1463 = vmatprep.subr.mxu0 0.0
    %1464 = vmatpush1.msra.mxu0 0.0
    %1465 = vmatprep.subr.mxu0 0.0
    %1466 = vmatpush1.msra.mxu0 0.0
    %1467 = vmatprep.subr.mxu0 0.0
    %1468 = vmatpush1.msra.mxu0 0.0
    %1469 = vmatprep.subr.mxu0 0.0
    %1470 = vmatpush1.msra.mxu0 0.0
    %1471 = vmatprep.subr.mxu0 0.0
    %1472 = vmatpush1.msra.mxu0 0.0
    %1473 = vmatprep.subr.mxu0 0.0
    %1474 = vmatpush1.msra.mxu0 0.0
    %1475 = vmatprep.subr.mxu0 0.0
    %1476 = vmatpush1.msra.mxu0 0.0
    %1477 = vmatprep.subr.mxu0 0.0
    %1478 = vmatpush1.msra.mxu0 0.0
    %1479 = vmatprep.subr.mxu0 0.0
    %1480 = vmatpush1.msra.mxu0 0.0
    %1481 = vmatprep.subr.mxu0 0.0
    %1482 = vmatpush1.msra.mxu0 0.0
    %1483 = vmatprep.subr.mxu0 0.0
    %1484 = vmatpush1.msra.mxu0 0.0
    %1485 = vmatprep.subr.mxu0 0.0
    %1486 = vmatpush1.msra.mxu0 0.0
    %1487 = vmatprep.subr.mxu0 0.0
    %1488 = vmatpush1.msra.mxu0 0.0
    %1489 = vmatprep.subr.mxu0 0.0
    %1490 = vmatpush1.msra.mxu0 0.0
    %1491 = vmatprep.subr.mxu0 0.0
    %1492 = vmatpush1.msra.mxu0 0.0
    %1493 = vmatprep.subr.mxu0 0.0
    %1494 = vmatpush1.msra.mxu0 0.0
    %1495 = vmatprep.subr.mxu0 0.0
    %1496 = vmatpush1.msra.mxu0 0.0
    %1497 = vmatprep.subr.mxu0 0.0
    %1498 = vmatpush1.msra.mxu0 0.0
    %1499 = vmatprep.subr.mxu0 0.0
    %1500 = vmatpush1.msra.mxu0 0.0
    %1501 = vmatprep.subr.mxu0 0.0
    %1502 = vmatpush1.msra.mxu0 0.0
    %1503 = vmatprep.subr.mxu0 0.0
    %1504 = vmatpush1.msra.mxu0 0.0
    %1505 = vmatprep.subr.mxu0 0.0
    %1506 = vmatpush1.msra.mxu0 0.0
    %1507 = vmatprep.mubr.f32.mxu0 0.0
    %v1508 = vand.u32 %v741, 4294901760
    %v1509 = vsub.f32 %v741, %v1508
    %v1510 = vand.u32 %v1509, 4294901760
    %v1511 = vsub.f32 %v1509, %v1510
    %v1512 = vand.u32 %v1511, 4294901760
    %1513 = vmatmul.mubr.f32.gmra.mrb[0].mxu0 %v1512
    %v1514 = vpop.f32.mrb[0].mxu0
    %v1515 = vadd.f32 0.0, %v1514
    %v1516 = vpop.f32.mrb[0].mxu0
    %1517 = vmatprep.mubr.f32.mxu0 0.0
    %v1518 = vand.u32 %v744, 4294901760
    %v1519 = vsub.f32 %v744, %v1518
    %v1520 = vand.u32 %v1519, 4294901760
    %v1521 = vsub.f32 %v1519, %v1520
    %v1522 = vand.u32 %v1521, 4294901760
    %1523 = vmatmul.mubr.f32.gmra.mrb[0].mxu0 %v1522
    %v1524 = vpop.f32.mrb[0].mxu0
    %v1525 = vadd.f32 0.0, %v1524
    %v1526 = vpop.f32.mrb[0].mxu0
    %1527 = vmatprep.mubr.f32.mxu0 0.0
    %v1528 = vand.u32 %v747, 4294901760
    %v1529 = vsub.f32 %v747, %v1528
    %v1530 = vand.u32 %v1529, 4294901760
    %v1531 = vsub.f32 %v1529, %v1530
    %v1532 = vand.u32 %v1531, 4294901760
    %1533 = vmatmul.mubr.f32.gmra.mrb[0].mxu0 %v1532
    %v1534 = vpop.f32.mrb[0].mxu0
    %v1535 = vadd.f32 0.0, %v1534
    %v1536 = vpop.f32.mrb[0].mxu0
    %1537 = vmatprep.mubr.f32.mxu0 0.0
    %v1538 = vand.u32 %v750, 4294901760
    %v1539 = vsub.f32 %v750, %v1538
    %v1540 = vand.u32 %v1539, 4294901760
    %v1541 = vsub.f32 %v1539, %v1540
    %v1542 = vand.u32 %v1541, 4294901760
    %1543 = vmatmul.mubr.f32.gmra.mrb[0].mxu0 %v1542
    %v1544 = vpop.f32.mrb[0].mxu0
    %v1545 = vadd.f32 0.0, %v1544
    %v1546 = vpop.f32.mrb[0].mxu0
    %1547 = vmatprep.mubr.f32.mxu0 0.0
    %v1548 = vand.u32 %v753, 4294901760
    %v1549 = vsub.f32 %v753, %v1548
    %v1550 = vand.u32 %v1549, 4294901760
    %v1551 = vsub.f32 %v1549, %v1550
    %v1552 = vand.u32 %v1551, 4294901760
    %1553 = vmatmul.mubr.f32.gmra.mrb[0].mxu0 %v1552
    %v1554 = vpop.f32.mrb[0].mxu0
    %v1555 = vadd.f32 0.0, %v1554
    %v1556 = vpop.f32.mrb[0].mxu0
    %1557 = vdwg.mxu0
    %1558 = vmatprep.subr.mxu0 0.0
    %v1559 = vand.u32 %v1428, 4294901760
    %v1560 = vsub.f32 %v1428, %v1559
    %v1561 = vand.u32 %v1560, 4294901760
    %v1562 = vsub.f32 %v1560, %v1561
    %v1563 = vand.u32 %v1562, 4294901760
    %1564 = vmatpush1.msra.mxu0 %v1563
    %1565 = vmatprep.subr.mxu0 0.0
    %v1566 = vand.u32 %v1429, 4294901760
    %v1567 = vsub.f32 %v1429, %v1566
    %v1568 = vand.u32 %v1567, 4294901760
    %v1569 = vsub.f32 %v1567, %v1568
    %v1570 = vand.u32 %v1569, 4294901760
    %1571 = vmatpush1.msra.mxu0 %v1570
    %1572 = vmatprep.subr.mxu0 0.0
    %v1573 = vand.u32 %v1430, 4294901760
    %v1574 = vsub.f32 %v1430, %v1573
    %v1575 = vand.u32 %v1574, 4294901760
    %v1576 = vsub.f32 %v1574, %v1575
    %v1577 = vand.u32 %v1576, 4294901760
    %1578 = vmatpush1.msra.mxu0 %v1577
    %1579 = vmatprep.subr.mxu0 0.0
    %v1580 = vand.u32 %v1431, 4294901760
    %v1581 = vsub.f32 %v1431, %v1580
    %v1582 = vand.u32 %v1581, 4294901760
    %v1583 = vsub.f32 %v1581, %v1582
    %v1584 = vand.u32 %v1583, 4294901760
    %1585 = vmatpush1.msra.mxu0 %v1584
    %1586 = vmatprep.subr.mxu0 0.0
    %v1587 = vand.u32 %v1436, 4294901760
    %v1588 = vsub.f32 %v1436, %v1587
    %v1589 = vand.u32 %v1588, 4294901760
    %v1590 = vsub.f32 %v1588, %v1589
    %v1591 = vand.u32 %v1590, 4294901760
    %1592 = vmatpush1.msra.mxu0 %v1591
    %1593 = vmatprep.subr.mxu0 0.0
    %1594 = vmatpush1.msra.mxu0 0.0
    %1595 = vmatprep.subr.mxu0 0.0
    %1596 = vmatpush1.msra.mxu0 0.0
    %1597 = vmatprep.subr.mxu0 0.0
    %1598 = vmatpush1.msra.mxu0 0.0
    %1599 = vmatprep.subr.mxu0 0.0
    %1600 = vmatpush1.msra.mxu0 0.0
    %1601 = vmatprep.subr.mxu0 0.0
    %1602 = vmatpush1.msra.mxu0 0.0
    %1603 = vmatprep.subr.mxu0 0.0
    %1604 = vmatpush1.msra.mxu0 0.0
    %1605 = vmatprep.subr.mxu0 0.0
    %1606 = vmatpush1.msra.mxu0 0.0
    %1607 = vmatprep.subr.mxu0 0.0
    %1608 = vmatpush1.msra.mxu0 0.0
    %1609 = vmatprep.subr.mxu0 0.0
    %1610 = vmatpush1.msra.mxu0 0.0
    %1611 = vmatprep.subr.mxu0 0.0
    %1612 = vmatpush1.msra.mxu0 0.0
    %1613 = vmatprep.subr.mxu0 0.0
    %1614 = vmatpush1.msra.mxu0 0.0
    %1615 = vmatprep.subr.mxu0 0.0
    %1616 = vmatpush1.msra.mxu0 0.0
    %1617 = vmatprep.subr.mxu0 0.0
    %1618 = vmatpush1.msra.mxu0 0.0
    %1619 = vmatprep.subr.mxu0 0.0
    %1620 = vmatpush1.msra.mxu0 0.0
    %1621 = vmatprep.subr.mxu0 0.0
    %1622 = vmatpush1.msra.mxu0 0.0
    %1623 = vmatprep.subr.mxu0 0.0
    %1624 = vmatpush1.msra.mxu0 0.0
    %1625 = vmatprep.subr.mxu0 0.0
    %1626 = vmatpush1.msra.mxu0 0.0
    %1627 = vmatprep.subr.mxu0 0.0
    %1628 = vmatpush1.msra.mxu0 0.0
    %1629 = vmatprep.subr.mxu0 0.0
    %1630 = vmatpush1.msra.mxu0 0.0
    %1631 = vmatprep.subr.mxu0 0.0
    %1632 = vmatpush1.msra.mxu0 0.0
    %1633 = vmatprep.subr.mxu0 0.0
    %1634 = vmatpush1.msra.mxu0 0.0
    %1635 = vmatprep.subr.mxu0 0.0
    %1636 = vmatpush1.msra.mxu0 0.0
    %1637 = vmatprep.subr.mxu0 0.0
    %1638 = vmatpush1.msra.mxu0 0.0
    %1639 = vmatprep.subr.mxu0 0.0
    %1640 = vmatpush1.msra.mxu0 0.0
    %1641 = vmatprep.subr.mxu0 0.0
    %1642 = vmatpush1.msra.mxu0 0.0
    %1643 = vmatprep.subr.mxu0 0.0
    %1644 = vmatpush1.msra.mxu0 0.0
    %1645 = vmatprep.subr.mxu0 0.0
    %1646 = vmatpush1.msra.mxu0 0.0
    %1647 = vmatprep.mubr.f32.mxu0 0.0
    %v1648 = vand.u32 %v741, 4294901760
    %1649 = vmatmul.mubr.f32.gmra.mrb[0].mxu0 %v1648
    %v1650 = vpop.f32.mrb[0].mxu0
    %v1651 = vadd.f32 %v1515, %v1650
    %v1652 = vpop.f32.mrb[0].mxu0
    %1653 = vmatprep.mubr.f32.mxu0 0.0
    %v1654 = vand.u32 %v744, 4294901760
    %1655 = vmatmul.mubr.f32.gmra.mrb[0].mxu0 %v1654
    %v1656 = vpop.f32.mrb[0].mxu0
    %v1657 = vadd.f32 %v1525, %v1656
    %v1658 = vpop.f32.mrb[0].mxu0
    %1659 = vmatprep.mubr.f32.mxu0 0.0
    %v1660 = vand.u32 %v747, 4294901760
    %1661 = vmatmul.mubr.f32.gmra.mrb[0].mxu0 %v1660
    %v1662 = vpop.f32.mrb[0].mxu0
    %v1663 = vadd.f32 %v1535, %v1662
    %v1664 = vpop.f32.mrb[0].mxu0
    %1665 = vmatprep.mubr.f32.mxu0 0.0
    %v1666 = vand.u32 %v750, 4294901760
    %1667 = vmatmul.mubr.f32.gmra.mrb[0].mxu0 %v1666
    %v1668 = vpop.f32.mrb[0].mxu0
    %v1669 = vadd.f32 %v1545, %v1668
    %v1670 = vpop.f32.mrb[0].mxu0
    %1671 = vmatprep.mubr.f32.mxu0 0.0
    %v1672 = vand.u32 %v753, 4294901760
    %1673 = vmatmul.mubr.f32.gmra.mrb[0].mxu0 %v1672
    %v1674 = vpop.f32.mrb[0].mxu0
    %v1675 = vadd.f32 %v1555, %v1674
    %v1676 = vpop.f32.mrb[0].mxu0
    %1677 = vdwg.mxu0
    %1678 = vmatprep.subr.mxu0 0.0
    %v1679 = vand.u32 %v1428, 4294901760
    %v1680 = vsub.f32 %v1428, %v1679
    %1681 = vmatpush1.msra.mxu0 %v1680
    %1682 = vmatprep.subr.mxu0 0.0
    %v1683 = vand.u32 %v1429, 4294901760
    %v1684 = vsub.f32 %v1429, %v1683
    %1685 = vmatpush1.msra.mxu0 %v1684
    %1686 = vmatprep.subr.mxu0 0.0
    %v1687 = vand.u32 %v1430, 4294901760
    %v1688 = vsub.f32 %v1430, %v1687
    %1689 = vmatpush1.msra.mxu0 %v1688
    %1690 = vmatprep.subr.mxu0 0.0
    %v1691 = vand.u32 %v1431, 4294901760
    %v1692 = vsub.f32 %v1431, %v1691
    %1693 = vmatpush1.msra.mxu0 %v1692
    %1694 = vmatprep.subr.mxu0 0.0
    %v1695 = vand.u32 %v1436, 4294901760
    %v1696 = vsub.f32 %v1436, %v1695
    %1697 = vmatpush1.msra.mxu0 %v1696
    %1698 = vmatprep.subr.mxu0 0.0
    %1699 = vmatpush1.msra.mxu0 0.0
    %1700 = vmatprep.subr.mxu0 0.0
    %1701 = vmatpush1.msra.mxu0 0.0
    %1702 = vmatprep.subr.mxu0 0.0
    %1703 = vmatpush1.msra.mxu0 0.0
    %1704 = vmatprep.subr.mxu0 0.0
    %1705 = vmatpush1.msra.mxu0 0.0
    %1706 = vmatprep.subr.mxu0 0.0
    %1707 = vmatpush1.msra.mxu0 0.0
    %1708 = vmatprep.subr.mxu0 0.0
    %1709 = vmatpush1.msra.mxu0 0.0
    %1710 = vmatprep.subr.mxu0 0.0
    %1711 = vmatpush1.msra.mxu0 0.0
    %1712 = vmatprep.subr.mxu0 0.0
    %1713 = vmatpush1.msra.mxu0 0.0
    %1714 = vmatprep.subr.mxu0 0.0
    %1715 = vmatpush1.msra.mxu0 0.0
    %1716 = vmatprep.subr.mxu0 0.0
    %1717 = vmatpush1.msra.mxu0 0.0
    %1718 = vmatprep.subr.mxu0 0.0
    %1719 = vmatpush1.msra.mxu0 0.0
    %1720 = vmatprep.subr.mxu0 0.0
    %1721 = vmatpush1.msra.mxu0 0.0
    %1722 = vmatprep.subr.mxu0 0.0
    %1723 = vmatpush1.msra.mxu0 0.0
    %1724 = vmatprep.subr.mxu0 0.0
    %1725 = vmatpush1.msra.mxu0 0.0
    %1726 = vmatprep.subr.mxu0 0.0
    %1727 = vmatpush1.msra.mxu0 0.0
    %1728 = vmatprep.subr.mxu0 0.0
    %1729 = vmatpush1.msra.mxu0 0.0
    %1730 = vmatprep.subr.mxu0 0.0
    %1731 = vmatpush1.msra.mxu0 0.0
    %1732 = vmatprep.subr.mxu0 0.0
    %1733 = vmatpush1.msra.mxu0 0.0
    %1734 = vmatprep.subr.mxu0 0.0
    %1735 = vmatpush1.msra.mxu0 0.0
    %1736 = vmatprep.subr.mxu0 0.0
    %1737 = vmatpush1.msra.mxu0 0.0
    %1738 = vmatprep.subr.mxu0 0.0
    %1739 = vmatpush1.msra.mxu0 0.0
    %1740 = vmatprep.subr.mxu0 0.0
    %1741 = vmatpush1.msra.mxu0 0.0
    %1742 = vmatprep.subr.mxu0 0.0
    %1743 = vmatpush1.msra.mxu0 0.0
    %1744 = vmatprep.subr.mxu0 0.0
    %1745 = vmatpush1.msra.mxu0 0.0
    %1746 = vmatprep.subr.mxu0 0.0
    %1747 = vmatpush1.msra.mxu0 0.0
    %1748 = vmatprep.subr.mxu0 0.0
    %1749 = vmatpush1.msra.mxu0 0.0
    %1750 = vmatprep.subr.mxu0 0.0
    %1751 = vmatpush1.msra.mxu0 0.0
    %1752 = vmatprep.mubr.f32.mxu0 0.0
    %v1753 = vand.u32 %v741, 4294901760
    %v1754 = vsub.f32 %v741, %v1753
    %1755 = vmatmul.mubr.f32.gmra.mrb[0].mxu0 %v1754
    %v1756 = vpop.f32.mrb[0].mxu0
    %v1757 = vadd.f32 %v1651, %v1756
    %v1758 = vpop.f32.mrb[0].mxu0
    %1759 = vmatprep.mubr.f32.mxu0 0.0
    %v1760 = vand.u32 %v744, 4294901760
    %v1761 = vsub.f32 %v744, %v1760
    %1762 = vmatmul.mubr.f32.gmra.mrb[0].mxu0 %v1761
    %v1763 = vpop.f32.mrb[0].mxu0
    %v1764 = vadd.f32 %v1657, %v1763
    %v1765 = vpop.f32.mrb[0].mxu0
    %1766 = vmatprep.mubr.f32.mxu0 0.0
    %v1767 = vand.u32 %v747, 4294901760
    %v1768 = vsub.f32 %v747, %v1767
    %1769 = vmatmul.mubr.f32.gmra.mrb[0].mxu0 %v1768
    %v1770 = vpop.f32.mrb[0].mxu0
    %v1771 = vadd.f32 %v1663, %v1770
    %v1772 = vpop.f32.mrb[0].mxu0
    %1773 = vmatprep.mubr.f32.mxu0 0.0
    %v1774 = vand.u32 %v750, 4294901760
    %v1775 = vsub.f32 %v750, %v1774
    %1776 = vmatmul.mubr.f32.gmra.mrb[0].mxu0 %v1775
    %v1777 = vpop.f32.mrb[0].mxu0
    %v1778 = vadd.f32 %v1669, %v1777
    %v1779 = vpop.f32.mrb[0].mxu0
    %1780 = vmatprep.mubr.f32.mxu0 0.0
    %v1781 = vand.u32 %v753, 4294901760
    %v1782 = vsub.f32 %v753, %v1781
    %1783 = vmatmul.mubr.f32.gmra.mrb[0].mxu0 %v1782
    %v1784 = vpop.f32.mrb[0].mxu0
    %v1785 = vadd.f32 %v1675, %v1784
    %v1786 = vpop.f32.mrb[0].mxu0
    %1787 = vdwg.mxu0
    %1788 = vmatprep.subr.mxu0 0.0
    %v1789 = vand.u32 %v1428, 4294901760
    %1790 = vmatpush1.msra.mxu0 %v1789
    %1791 = vmatprep.subr.mxu0 0.0
    %v1792 = vand.u32 %v1429, 4294901760
    %1793 = vmatpush1.msra.mxu0 %v1792
    %1794 = vmatprep.subr.mxu0 0.0
    %v1795 = vand.u32 %v1430, 4294901760
    %1796 = vmatpush1.msra.mxu0 %v1795
    %1797 = vmatprep.subr.mxu0 0.0
    %v1798 = vand.u32 %v1431, 4294901760
    %1799 = vmatpush1.msra.mxu0 %v1798
    %1800 = vmatprep.subr.mxu0 0.0
    %v1801 = vand.u32 %v1436, 4294901760
    %1802 = vmatpush1.msra.mxu0 %v1801
    %1803 = vmatprep.subr.mxu0 0.0
    %1804 = vmatpush1.msra.mxu0 0.0
    %1805 = vmatprep.subr.mxu0 0.0
    %1806 = vmatpush1.msra.mxu0 0.0
    %1807 = vmatprep.subr.mxu0 0.0
    %1808 = vmatpush1.msra.mxu0 0.0
    %1809 = vmatprep.subr.mxu0 0.0
    %1810 = vmatpush1.msra.mxu0 0.0
    %1811 = vmatprep.subr.mxu0 0.0
    %1812 = vmatpush1.msra.mxu0 0.0
    %1813 = vmatprep.subr.mxu0 0.0
    %1814 = vmatpush1.msra.mxu0 0.0
    %1815 = vmatprep.subr.mxu0 0.0
    %1816 = vmatpush1.msra.mxu0 0.0
    %1817 = vmatprep.subr.mxu0 0.0
    %1818 = vmatpush1.msra.mxu0 0.0
    %1819 = vmatprep.subr.mxu0 0.0
    %1820 = vmatpush1.msra.mxu0 0.0
    %1821 = vmatprep.subr.mxu0 0.0
    %1822 = vmatpush1.msra.mxu0 0.0
    %1823 = vmatprep.subr.mxu0 0.0
    %1824 = vmatpush1.msra.mxu0 0.0
    %1825 = vmatprep.subr.mxu0 0.0
    %1826 = vmatpush1.msra.mxu0 0.0
    %1827 = vmatprep.subr.mxu0 0.0
    %1828 = vmatpush1.msra.mxu0 0.0
    %1829 = vmatprep.subr.mxu0 0.0
    %1830 = vmatpush1.msra.mxu0 0.0
    %1831 = vmatprep.subr.mxu0 0.0
    %1832 = vmatpush1.msra.mxu0 0.0
    %1833 = vmatprep.subr.mxu0 0.0
    %1834 = vmatpush1.msra.mxu0 0.0
    %1835 = vmatprep.subr.mxu0 0.0
    %1836 = vmatpush1.msra.mxu0 0.0
    %1837 = vmatprep.subr.mxu0 0.0
    %1838 = vmatpush1.msra.mxu0 0.0
    %1839 = vmatprep.subr.mxu0 0.0
    %1840 = vmatpush1.msra.mxu0 0.0
    %1841 = vmatprep.subr.mxu0 0.0
    %1842 = vmatpush1.msra.mxu0 0.0
    %1843 = vmatprep.subr.mxu0 0.0
    %1844 = vmatpush1.msra.mxu0 0.0
    %1845 = vmatprep.subr.mxu0 0.0
    %1846 = vmatpush1.msra.mxu0 0.0
    %1847 = vmatprep.subr.mxu0 0.0
    %1848 = vmatpush1.msra.mxu0 0.0
    %1849 = vmatprep.subr.mxu0 0.0
    %1850 = vmatpush1.msra.mxu0 0.0
    %1851 = vmatprep.subr.mxu0 0.0
    %1852 = vmatpush1.msra.mxu0 0.0
    %1853 = vmatprep.subr.mxu0 0.0
    %1854 = vmatpush1.msra.mxu0 0.0
    %1855 = vmatprep.subr.mxu0 0.0
    %1856 = vmatpush1.msra.mxu0 0.0
    %1857 = vmatprep.mubr.f32.mxu0 0.0
    %v1858 = vand.u32 %v741, 4294901760
    %v1859 = vsub.f32 %v741, %v1858
    %v1860 = vand.u32 %v1859, 4294901760
    %1861 = vmatmul.mubr.f32.gmra.mrb[0].mxu0 %v1860
    %v1862 = vpop.f32.mrb[0].mxu0
    %v1863 = vadd.f32 %v1757, %v1862
    %v1864 = vpop.f32.mrb[0].mxu0
    %1865 = vmatprep.mubr.f32.mxu0 0.0
    %v1866 = vand.u32 %v744, 4294901760
    %v1867 = vsub.f32 %v744, %v1866
    %v1868 = vand.u32 %v1867, 4294901760
    %1869 = vmatmul.mubr.f32.gmra.mrb[0].mxu0 %v1868
    %v1870 = vpop.f32.mrb[0].mxu0
    %v1871 = vadd.f32 %v1764, %v1870
    %v1872 = vpop.f32.mrb[0].mxu0
    %1873 = vmatprep.mubr.f32.mxu0 0.0
    %v1874 = vand.u32 %v747, 4294901760
    %v1875 = vsub.f32 %v747, %v1874
    %v1876 = vand.u32 %v1875, 4294901760
    %1877 = vmatmul.mubr.f32.gmra.mrb[0].mxu0 %v1876
    %v1878 = vpop.f32.mrb[0].mxu0
    %v1879 = vadd.f32 %v1771, %v1878
    %v1880 = vpop.f32.mrb[0].mxu0
    %1881 = vmatprep.mubr.f32.mxu0 0.0
    %v1882 = vand.u32 %v750, 4294901760
    %v1883 = vsub.f32 %v750, %v1882
    %v1884 = vand.u32 %v1883, 4294901760
    %1885 = vmatmul.mubr.f32.gmra.mrb[0].mxu0 %v1884
    %v1886 = vpop.f32.mrb[0].mxu0
    %v1887 = vadd.f32 %v1778, %v1886
    %v1888 = vpop.f32.mrb[0].mxu0
    %1889 = vmatprep.mubr.f32.mxu0 0.0
    %v1890 = vand.u32 %v753, 4294901760
    %v1891 = vsub.f32 %v753, %v1890
    %v1892 = vand.u32 %v1891, 4294901760
    %1893 = vmatmul.mubr.f32.gmra.mrb[0].mxu0 %v1892
    %v1894 = vpop.f32.mrb[0].mxu0
    %v1895 = vadd.f32 %v1785, %v1894
    %v1896 = vpop.f32.mrb[0].mxu0
    %1897 = vdwg.mxu0
    %1898 = vmatprep.subr.mxu0 0.0
    %v1899 = vand.u32 %v1428, 4294901760
    %v1900 = vsub.f32 %v1428, %v1899
    %v1901 = vand.u32 %v1900, 4294901760
    %1902 = vmatpush1.msra.mxu0 %v1901
    %1903 = vmatprep.subr.mxu0 0.0
    %v1904 = vand.u32 %v1429, 4294901760
    %v1905 = vsub.f32 %v1429, %v1904
    %v1906 = vand.u32 %v1905, 4294901760
    %1907 = vmatpush1.msra.mxu0 %v1906
    %1908 = vmatprep.subr.mxu0 0.0
    %v1909 = vand.u32 %v1430, 4294901760
    %v1910 = vsub.f32 %v1430, %v1909
    %v1911 = vand.u32 %v1910, 4294901760
    %1912 = vmatpush1.msra.mxu0 %v1911
    %1913 = vmatprep.subr.mxu0 0.0
    %v1914 = vand.u32 %v1431, 4294901760
    %v1915 = vsub.f32 %v1431, %v1914
    %v1916 = vand.u32 %v1915, 4294901760
    %1917 = vmatpush1.msra.mxu0 %v1916
    %1918 = vmatprep.subr.mxu0 0.0
    %v1919 = vand.u32 %v1436, 4294901760
    %v1920 = vsub.f32 %v1436, %v1919
    %v1921 = vand.u32 %v1920, 4294901760
    %1922 = vmatpush1.msra.mxu0 %v1921
    %1923 = vmatprep.subr.mxu0 0.0
    %1924 = vmatpush1.msra.mxu0 0.0
    %1925 = vmatprep.subr.mxu0 0.0
    %1926 = vmatpush1.msra.mxu0 0.0
    %1927 = vmatprep.subr.mxu0 0.0
    %1928 = vmatpush1.msra.mxu0 0.0
    %1929 = vmatprep.subr.mxu0 0.0
    %1930 = vmatpush1.msra.mxu0 0.0
    %1931 = vmatprep.subr.mxu0 0.0
    %1932 = vmatpush1.msra.mxu0 0.0
    %1933 = vmatprep.subr.mxu0 0.0
    %1934 = vmatpush1.msra.mxu0 0.0
    %1935 = vmatprep.subr.mxu0 0.0
    %1936 = vmatpush1.msra.mxu0 0.0
    %1937 = vmatprep.subr.mxu0 0.0
    %1938 = vmatpush1.msra.mxu0 0.0
    %1939 = vmatprep.subr.mxu0 0.0
    %1940 = vmatpush1.msra.mxu0 0.0
    %1941 = vmatprep.subr.mxu0 0.0
    %1942 = vmatpush1.msra.mxu0 0.0
    %1943 = vmatprep.subr.mxu0 0.0
    %1944 = vmatpush1.msra.mxu0 0.0
    %1945 = vmatprep.subr.mxu0 0.0
    %1946 = vmatpush1.msra.mxu0 0.0
    %1947 = vmatprep.subr.mxu0 0.0
    %1948 = vmatpush1.msra.mxu0 0.0
    %1949 = vmatprep.subr.mxu0 0.0
    %1950 = vmatpush1.msra.mxu0 0.0
    %1951 = vmatprep.subr.mxu0 0.0
    %1952 = vmatpush1.msra.mxu0 0.0
    %1953 = vmatprep.subr.mxu0 0.0
    %1954 = vmatpush1.msra.mxu0 0.0
    %1955 = vmatprep.subr.mxu0 0.0
    %1956 = vmatpush1.msra.mxu0 0.0
    %1957 = vmatprep.subr.mxu0 0.0
    %1958 = vmatpush1.msra.mxu0 0.0
    %1959 = vmatprep.subr.mxu0 0.0
    %1960 = vmatpush1.msra.mxu0 0.0
    %1961 = vmatprep.subr.mxu0 0.0
    %1962 = vmatpush1.msra.mxu0 0.0
    %1963 = vmatprep.subr.mxu0 0.0
    %1964 = vmatpush1.msra.mxu0 0.0
    %1965 = vmatprep.subr.mxu0 0.0
    %1966 = vmatpush1.msra.mxu0 0.0
    %1967 = vmatprep.subr.mxu0 0.0
    %1968 = vmatpush1.msra.mxu0 0.0
    %1969 = vmatprep.subr.mxu0 0.0
    %1970 = vmatpush1.msra.mxu0 0.0
    %1971 = vmatprep.subr.mxu0 0.0
    %1972 = vmatpush1.msra.mxu0 0.0
    %1973 = vmatprep.subr.mxu0 0.0
    %1974 = vmatpush1.msra.mxu0 0.0
    %1975 = vmatprep.subr.mxu0 0.0
    %1976 = vmatpush1.msra.mxu0 0.0
    %1977 = vmatprep.mubr.f32.mxu0 0.0
    %v1978 = vand.u32 %v741, 4294901760
    %1979 = vmatmul.mubr.f32.gmra.mrb[0].mxu0 %v1978
    %v1980 = vpop.f32.mrb[0].mxu0
    %v1981 = vadd.f32 %v1863, %v1980
    %v1982 = vpop.f32.mrb[0].mxu0
    %1983 = vmatprep.mubr.f32.mxu0 0.0
    %v1984 = vand.u32 %v744, 4294901760
    %1985 = vmatmul.mubr.f32.gmra.mrb[0].mxu0 %v1984
    %v1986 = vpop.f32.mrb[0].mxu0
    %v1987 = vadd.f32 %v1871, %v1986
    %v1988 = vpop.f32.mrb[0].mxu0
    %1989 = vmatprep.mubr.f32.mxu0 0.0
    %v1990 = vand.u32 %v747, 4294901760
    %1991 = vmatmul.mubr.f32.gmra.mrb[0].mxu0 %v1990
    %v1992 = vpop.f32.mrb[0].mxu0
    %v1993 = vadd.f32 %v1879, %v1992
    %v1994 = vpop.f32.mrb[0].mxu0
    %1995 = vmatprep.mubr.f32.mxu0 0.0
    %v1996 = vand.u32 %v750, 4294901760
    %1997 = vmatmul.mubr.f32.gmra.mrb[0].mxu0 %v1996
    %v1998 = vpop.f32.mrb[0].mxu0
    %v1999 = vadd.f32 %v1887, %v1998
    %v2000 = vpop.f32.mrb[0].mxu0
    %2001 = vmatprep.mubr.f32.mxu0 0.0
    %v2002 = vand.u32 %v753, 4294901760
    %2003 = vmatmul.mubr.f32.gmra.mrb[0].mxu0 %v2002
    %v2004 = vpop.f32.mrb[0].mxu0
    %v2005 = vadd.f32 %v1895, %v2004
    %v2006 = vpop.f32.mrb[0].mxu0
    %2007 = vdwg.mxu0
    %2008 = vmatprep.subr.mxu0 0.0
    %v2009 = vand.u32 %v1428, 4294901760
    %2010 = vmatpush1.msra.mxu0 %v2009
    %2011 = vmatprep.subr.mxu0 0.0
    %v2012 = vand.u32 %v1429, 4294901760
    %2013 = vmatpush1.msra.mxu0 %v2012
    %2014 = vmatprep.subr.mxu0 0.0
    %v2015 = vand.u32 %v1430, 4294901760
    %2016 = vmatpush1.msra.mxu0 %v2015
    %2017 = vmatprep.subr.mxu0 0.0
    %v2018 = vand.u32 %v1431, 4294901760
    %2019 = vmatpush1.msra.mxu0 %v2018
    %2020 = vmatprep.subr.mxu0 0.0
    %v2021 = vand.u32 %v1436, 4294901760
    %2022 = vmatpush1.msra.mxu0 %v2021
    %2023 = vmatprep.subr.mxu0 0.0
    %2024 = vmatpush1.msra.mxu0 0.0
    %2025 = vmatprep.subr.mxu0 0.0
    %2026 = vmatpush1.msra.mxu0 0.0
    %2027 = vmatprep.subr.mxu0 0.0
    %2028 = vmatpush1.msra.mxu0 0.0
    %2029 = vmatprep.subr.mxu0 0.0
    %2030 = vmatpush1.msra.mxu0 0.0
    %2031 = vmatprep.subr.mxu0 0.0
    %2032 = vmatpush1.msra.mxu0 0.0
    %2033 = vmatprep.subr.mxu0 0.0
    %2034 = vmatpush1.msra.mxu0 0.0
    %2035 = vmatprep.subr.mxu0 0.0
    %2036 = vmatpush1.msra.mxu0 0.0
    %2037 = vmatprep.subr.mxu0 0.0
    %2038 = vmatpush1.msra.mxu0 0.0
    %2039 = vmatprep.subr.mxu0 0.0
    %2040 = vmatpush1.msra.mxu0 0.0
    %2041 = vmatprep.subr.mxu0 0.0
    %2042 = vmatpush1.msra.mxu0 0.0
    %2043 = vmatprep.subr.mxu0 0.0
    %2044 = vmatpush1.msra.mxu0 0.0
    %2045 = vmatprep.subr.mxu0 0.0
    %2046 = vmatpush1.msra.mxu0 0.0
    %2047 = vmatprep.subr.mxu0 0.0
    %2048 = vmatpush1.msra.mxu0 0.0
    %2049 = vmatprep.subr.mxu0 0.0
    %2050 = vmatpush1.msra.mxu0 0.0
    %2051 = vmatprep.subr.mxu0 0.0
    %2052 = vmatpush1.msra.mxu0 0.0
    %2053 = vmatprep.subr.mxu0 0.0
    %2054 = vmatpush1.msra.mxu0 0.0
    %2055 = vmatprep.subr.mxu0 0.0
    %2056 = vmatpush1.msra.mxu0 0.0
    %2057 = vmatprep.subr.mxu0 0.0
    %2058 = vmatpush1.msra.mxu0 0.0
    %2059 = vmatprep.subr.mxu0 0.0
    %2060 = vmatpush1.msra.mxu0 0.0
    %2061 = vmatprep.subr.mxu0 0.0
    %2062 = vmatpush1.msra.mxu0 0.0
    %2063 = vmatprep.subr.mxu0 0.0
    %2064 = vmatpush1.msra.mxu0 0.0
    %2065 = vmatprep.subr.mxu0 0.0
    %2066 = vmatpush1.msra.mxu0 0.0
    %2067 = vmatprep.subr.mxu0 0.0
    %2068 = vmatpush1.msra.mxu0 0.0
    %2069 = vmatprep.subr.mxu0 0.0
    %2070 = vmatpush1.msra.mxu0 0.0
    %2071 = vmatprep.subr.mxu0 0.0
    %2072 = vmatpush1.msra.mxu0 0.0
    %2073 = vmatprep.subr.mxu0 0.0
    %2074 = vmatpush1.msra.mxu0 0.0
    %2075 = vmatprep.subr.mxu0 0.0
    %2076 = vmatpush1.msra.mxu0 0.0
    %2077 = vmatprep.mubr.f32.mxu0 0.0
    %v2078 = vand.u32 %v741, 4294901760
    %2079 = vmatmul.mubr.f32.gmra.mrb[0].mxu0 %v2078
    %v2080 = vpop.f32.mrb[0].mxu0
    %v2081 = vadd.f32 %v1981, %v2080
    %v2082 = vpop.f32.mrb[0].mxu0
    %2083 = vmatprep.mubr.f32.mxu0 0.0
    %v2084 = vand.u32 %v744, 4294901760
    %2085 = vmatmul.mubr.f32.gmra.mrb[0].mxu0 %v2084
    %v2086 = vpop.f32.mrb[0].mxu0
    %v2087 = vadd.f32 %v1987, %v2086
    %v2088 = vpop.f32.mrb[0].mxu0
    %2089 = vmatprep.mubr.f32.mxu0 0.0
    %v2090 = vand.u32 %v747, 4294901760
    %2091 = vmatmul.mubr.f32.gmra.mrb[0].mxu0 %v2090
    %v2092 = vpop.f32.mrb[0].mxu0
    %v2093 = vadd.f32 %v1993, %v2092
    %v2094 = vpop.f32.mrb[0].mxu0
    %2095 = vmatprep.mubr.f32.mxu0 0.0
    %v2096 = vand.u32 %v750, 4294901760
    %2097 = vmatmul.mubr.f32.gmra.mrb[0].mxu0 %v2096
    %v2098 = vpop.f32.mrb[0].mxu0
    %v2099 = vadd.f32 %v1999, %v2098
    %v2100 = vpop.f32.mrb[0].mxu0
    %2101 = vmatprep.mubr.f32.mxu0 0.0
    %v2102 = vand.u32 %v753, 4294901760
    %2103 = vmatmul.mubr.f32.gmra.mrb[0].mxu0 %v2102
    %v2104 = vpop.f32.mrb[0].mxu0
    %v2105 = vadd.f32 %v2005, %v2104
    %v2106 = vpop.f32.mrb[0].mxu0
    %2107 = vdwg.mxu0
    %v2108 = vlaneseq
    %v2109 = vshrl.u32 %v2108, 7
    %v2110 = vsub.s32 0, %v2109
    %v2111 = vrot.slane %v1434, %v2110
    %vm2112 = vcmask 64512
    %v2114 = vsel %vm2112, %v2081, 0
    %v2117 = vsel %vm2112, %v2087, 0
    %v2120 = vsel %vm2112, %v2093, 0
    %v2123 = vsel %vm2112, %v2099, 0
    %v2126 = vsel %vm2112, %v2105, 0
    %2128 = vmatprep.subr.mxu0 0.0
    %v2129 = vand.u32 %v1433, 4294901760
    %2130 = vmatpush1.msra.mxu0 %v2129
    %2131 = vmatprep.subr.mxu0 0.0
    %2132 = vmatpush1.msra.mxu0 0.0
    %2133 = vmatprep.subr.mxu0 0.0
    %2134 = vmatpush1.msra.mxu0 0.0
    %2135 = vmatprep.subr.mxu0 0.0
    %2136 = vmatpush1.msra.mxu0 0.0
    %2137 = vmatprep.subr.mxu0 0.0
    %2138 = vmatpush1.msra.mxu0 0.0
    %2139 = vmatprep.subr.mxu0 0.0
    %2140 = vmatpush1.msra.mxu0 0.0
    %2141 = vmatprep.subr.mxu0 0.0
    %2142 = vmatpush1.msra.mxu0 0.0
    %2143 = vmatprep.subr.mxu0 0.0
    %2144 = vmatpush1.msra.mxu0 0.0
    %2145 = vmatprep.subr.mxu0 0.0
    %2146 = vmatpush1.msra.mxu0 0.0
    %2147 = vmatprep.subr.mxu0 0.0
    %2148 = vmatpush1.msra.mxu0 0.0
    %2149 = vmatprep.subr.mxu0 0.0
    %2150 = vmatpush1.msra.mxu0 0.0
    %2151 = vmatprep.subr.mxu0 0.0
    %2152 = vmatpush1.msra.mxu0 0.0
    %2153 = vmatprep.subr.mxu0 0.0
    %2154 = vmatpush1.msra.mxu0 0.0
    %2155 = vmatprep.subr.mxu0 0.0
    %2156 = vmatpush1.msra.mxu0 0.0
    %2157 = vmatprep.subr.mxu0 0.0
    %2158 = vmatpush1.msra.mxu0 0.0
    %2159 = vmatprep.subr.mxu0 0.0
    %2160 = vmatpush1.msra.mxu0 0.0
    %2161 = vmatprep.subr.mxu0 0.0
    %2162 = vmatpush1.msra.mxu0 0.0
    %2163 = vmatprep.subr.mxu0 0.0
    %2164 = vmatpush1.msra.mxu0 0.0
    %2165 = vmatprep.subr.mxu0 0.0
    %2166 = vmatpush1.msra.mxu0 0.0
    %2167 = vmatprep.subr.mxu0 0.0
    %2168 = vmatpush1.msra.mxu0 0.0
    %2169 = vmatprep.subr.mxu0 0.0
    %2170 = vmatpush1.msra.mxu0 0.0
    %2171 = vmatprep.subr.mxu0 0.0
    %2172 = vmatpush1.msra.mxu0 0.0
    %2173 = vmatprep.subr.mxu0 0.0
    %2174 = vmatpush1.msra.mxu0 0.0
    %2175 = vmatprep.subr.mxu0 0.0
    %2176 = vmatpush1.msra.mxu0 0.0
    %2177 = vmatprep.subr.mxu0 0.0
    %2178 = vmatpush1.msra.mxu0 0.0
    %2179 = vmatprep.subr.mxu0 0.0
    %2180 = vmatpush1.msra.mxu0 0.0
    %2181 = vmatprep.subr.mxu0 0.0
    %2182 = vmatpush1.msra.mxu0 0.0
    %2183 = vmatprep.subr.mxu0 0.0
    %2184 = vmatpush1.msra.mxu0 0.0
    %2185 = vmatprep.subr.mxu0 0.0
    %2186 = vmatpush1.msra.mxu0 0.0
    %2187 = vmatprep.subr.mxu0 0.0
    %2188 = vmatpush1.msra.mxu0 0.0
    %2189 = vmatprep.subr.mxu0 0.0
    %2190 = vmatpush1.msra.mxu0 0.0
    %2191 = vmatprep.subr.mxu0 0.0
    %2192 = vmatpush1.msra.mxu0 0.0
    %2193 = vmatprep.mubr.f32.mxu0 0.0
    %v2194 = vand.u32 %v2114, 4294901760
    %v2195 = vsub.f32 %v2114, %v2194
    %v2196 = vand.u32 %v2195, 4294901760
    %v2197 = vsub.f32 %v2195, %v2196
    %v2198 = vand.u32 %v2197, 4294901760
    %2199 = vmatmul.mubr.f32.gmra.mrb[0].mxu0 %v2198
    %v2200 = vpop.f32.mrb[0].mxu0
    %v2201 = vadd.f32 %v2111, %v2200
    %v2202 = vpop.f32.mrb[0].mxu0
    %2203 = vmatprep.mubr.f32.mxu0 0.0
    %v2204 = vand.u32 %v2117, 4294901760
    %v2205 = vsub.f32 %v2117, %v2204
    %v2206 = vand.u32 %v2205, 4294901760
    %v2207 = vsub.f32 %v2205, %v2206
    %v2208 = vand.u32 %v2207, 4294901760
    %2209 = vmatmul.mubr.f32.gmra.mrb[0].mxu0 %v2208
    %v2210 = vpop.f32.mrb[0].mxu0
    %v2211 = vadd.f32 %v2111, %v2210
    %v2212 = vpop.f32.mrb[0].mxu0
    %2213 = vmatprep.mubr.f32.mxu0 0.0
    %v2214 = vand.u32 %v2120, 4294901760
    %v2215 = vsub.f32 %v2120, %v2214
    %v2216 = vand.u32 %v2215, 4294901760
    %v2217 = vsub.f32 %v2215, %v2216
    %v2218 = vand.u32 %v2217, 4294901760
    %2219 = vmatmul.mubr.f32.gmra.mrb[0].mxu0 %v2218
    %v2220 = vpop.f32.mrb[0].mxu0
    %v2221 = vadd.f32 %v2111, %v2220
    %v2222 = vpop.f32.mrb[0].mxu0
    %2223 = vmatprep.mubr.f32.mxu0 0.0
    %v2224 = vand.u32 %v2123, 4294901760
    %v2225 = vsub.f32 %v2123, %v2224
    %v2226 = vand.u32 %v2225, 4294901760
    %v2227 = vsub.f32 %v2225, %v2226
    %v2228 = vand.u32 %v2227, 4294901760
    %2229 = vmatmul.mubr.f32.gmra.mrb[0].mxu0 %v2228
    %v2230 = vpop.f32.mrb[0].mxu0
    %v2231 = vadd.f32 %v2111, %v2230
    %v2232 = vpop.f32.mrb[0].mxu0
    %2233 = vmatprep.mubr.f32.mxu0 0.0
    %v2234 = vand.u32 %v2126, 4294901760
    %v2235 = vsub.f32 %v2126, %v2234
    %v2236 = vand.u32 %v2235, 4294901760
    %v2237 = vsub.f32 %v2235, %v2236
    %v2238 = vand.u32 %v2237, 4294901760
    %2239 = vmatmul.mubr.f32.gmra.mrb[0].mxu0 %v2238
    %v2240 = vpop.f32.mrb[0].mxu0
    %v2241 = vadd.f32 %v2111, %v2240
    %v2242 = vpop.f32.mrb[0].mxu0
    %2243 = vdwg.mxu0
    %2244 = vmatprep.subr.mxu0 0.0
    %v2245 = vand.u32 %v1433, 4294901760
    %v2246 = vsub.f32 %v1433, %v2245
    %v2247 = vand.u32 %v2246, 4294901760
    %v2248 = vsub.f32 %v2246, %v2247
    %v2249 = vand.u32 %v2248, 4294901760
    %2250 = vmatpush1.msra.mxu0 %v2249
    %2251 = vmatprep.subr.mxu0 0.0
    %2252 = vmatpush1.msra.mxu0 0.0
    %2253 = vmatprep.subr.mxu0 0.0
    %2254 = vmatpush1.msra.mxu0 0.0
    %2255 = vmatprep.subr.mxu0 0.0
    %2256 = vmatpush1.msra.mxu0 0.0
    %2257 = vmatprep.subr.mxu0 0.0
    %2258 = vmatpush1.msra.mxu0 0.0
    %2259 = vmatprep.subr.mxu0 0.0
    %2260 = vmatpush1.msra.mxu0 0.0
    %2261 = vmatprep.subr.mxu0 0.0
    %2262 = vmatpush1.msra.mxu0 0.0
    %2263 = vmatprep.subr.mxu0 0.0
    %2264 = vmatpush1.msra.mxu0 0.0
    %2265 = vmatprep.subr.mxu0 0.0
    %2266 = vmatpush1.msra.mxu0 0.0
    %2267 = vmatprep.subr.mxu0 0.0
    %2268 = vmatpush1.msra.mxu0 0.0
    %2269 = vmatprep.subr.mxu0 0.0
    %2270 = vmatpush1.msra.mxu0 0.0
    %2271 = vmatprep.subr.mxu0 0.0
    %2272 = vmatpush1.msra.mxu0 0.0
    %2273 = vmatprep.subr.mxu0 0.0
    %2274 = vmatpush1.msra.mxu0 0.0
    %2275 = vmatprep.subr.mxu0 0.0
    %2276 = vmatpush1.msra.mxu0 0.0
    %2277 = vmatprep.subr.mxu0 0.0
    %2278 = vmatpush1.msra.mxu0 0.0
    %2279 = vmatprep.subr.mxu0 0.0
    %2280 = vmatpush1.msra.mxu0 0.0
    %2281 = vmatprep.subr.mxu0 0.0
    %2282 = vmatpush1.msra.mxu0 0.0
    %2283 = vmatprep.subr.mxu0 0.0
    %2284 = vmatpush1.msra.mxu0 0.0
    %2285 = vmatprep.subr.mxu0 0.0
    %2286 = vmatpush1.msra.mxu0 0.0
    %2287 = vmatprep.subr.mxu0 0.0
    %2288 = vmatpush1.msra.mxu0 0.0
    %2289 = vmatprep.subr.mxu0 0.0
    %2290 = vmatpush1.msra.mxu0 0.0
    %2291 = vmatprep.subr.mxu0 0.0
    %2292 = vmatpush1.msra.mxu0 0.0
    %2293 = vmatprep.subr.mxu0 0.0
    %2294 = vmatpush1.msra.mxu0 0.0
    %2295 = vmatprep.subr.mxu0 0.0
    %2296 = vmatpush1.msra.mxu0 0.0
    %2297 = vmatprep.subr.mxu0 0.0
    %2298 = vmatpush1.msra.mxu0 0.0
    %2299 = vmatprep.subr.mxu0 0.0
    %2300 = vmatpush1.msra.mxu0 0.0
    %2301 = vmatprep.subr.mxu0 0.0
    %2302 = vmatpush1.msra.mxu0 0.0
    %2303 = vmatprep.subr.mxu0 0.0
    %2304 = vmatpush1.msra.mxu0 0.0
    %2305 = vmatprep.subr.mxu0 0.0
    %2306 = vmatpush1.msra.mxu0 0.0
    %2307 = vmatprep.subr.mxu0 0.0
    %2308 = vmatpush1.msra.mxu0 0.0
    %2309 = vmatprep.subr.mxu0 0.0
    %2310 = vmatpush1.msra.mxu0 0.0
    %2311 = vmatprep.subr.mxu0 0.0
    %2312 = vmatpush1.msra.mxu0 0.0
    %2313 = vmatprep.mubr.f32.mxu0 0.0
    %v2314 = vand.u32 %v2114, 4294901760
    %2315 = vmatmul.mubr.f32.gmra.mrb[0].mxu0 %v2314
    %v2316 = vpop.f32.mrb[0].mxu0
    %v2317 = vadd.f32 %v2201, %v2316
    %v2318 = vpop.f32.mrb[0].mxu0
    %2319 = vmatprep.mubr.f32.mxu0 0.0
    %v2320 = vand.u32 %v2117, 4294901760
    %2321 = vmatmul.mubr.f32.gmra.mrb[0].mxu0 %v2320
    %v2322 = vpop.f32.mrb[0].mxu0
    %v2323 = vadd.f32 %v2211, %v2322
    %v2324 = vpop.f32.mrb[0].mxu0
    %2325 = vmatprep.mubr.f32.mxu0 0.0
    %v2326 = vand.u32 %v2120, 4294901760
    %2327 = vmatmul.mubr.f32.gmra.mrb[0].mxu0 %v2326
    %v2328 = vpop.f32.mrb[0].mxu0
    %v2329 = vadd.f32 %v2221, %v2328
    %v2330 = vpop.f32.mrb[0].mxu0
    %2331 = vmatprep.mubr.f32.mxu0 0.0
    %v2332 = vand.u32 %v2123, 4294901760
    %2333 = vmatmul.mubr.f32.gmra.mrb[0].mxu0 %v2332
    %v2334 = vpop.f32.mrb[0].mxu0
    %v2335 = vadd.f32 %v2231, %v2334
    %v2336 = vpop.f32.mrb[0].mxu0
    %2337 = vmatprep.mubr.f32.mxu0 0.0
    %v2338 = vand.u32 %v2126, 4294901760
    %2339 = vmatmul.mubr.f32.gmra.mrb[0].mxu0 %v2338
    %v2340 = vpop.f32.mrb[0].mxu0
    %v2341 = vadd.f32 %v2241, %v2340
    %v2342 = vpop.f32.mrb[0].mxu0
    %2343 = vdwg.mxu0
    %2344 = vmatprep.subr.mxu0 0.0
    %v2345 = vand.u32 %v1433, 4294901760
    %v2346 = vsub.f32 %v1433, %v2345
    %2347 = vmatpush1.msra.mxu0 %v2346
    %2348 = vmatprep.subr.mxu0 0.0
    %2349 = vmatpush1.msra.mxu0 0.0
    %2350 = vmatprep.subr.mxu0 0.0
    %2351 = vmatpush1.msra.mxu0 0.0
    %2352 = vmatprep.subr.mxu0 0.0
    %2353 = vmatpush1.msra.mxu0 0.0
    %2354 = vmatprep.subr.mxu0 0.0
    %2355 = vmatpush1.msra.mxu0 0.0
    %2356 = vmatprep.subr.mxu0 0.0
    %2357 = vmatpush1.msra.mxu0 0.0
    %2358 = vmatprep.subr.mxu0 0.0
    %2359 = vmatpush1.msra.mxu0 0.0
    %2360 = vmatprep.subr.mxu0 0.0
    %2361 = vmatpush1.msra.mxu0 0.0
    %2362 = vmatprep.subr.mxu0 0.0
    %2363 = vmatpush1.msra.mxu0 0.0
    %2364 = vmatprep.subr.mxu0 0.0
    %2365 = vmatpush1.msra.mxu0 0.0
    %2366 = vmatprep.subr.mxu0 0.0
    %2367 = vmatpush1.msra.mxu0 0.0
    %2368 = vmatprep.subr.mxu0 0.0
    %2369 = vmatpush1.msra.mxu0 0.0
    %2370 = vmatprep.subr.mxu0 0.0
    %2371 = vmatpush1.msra.mxu0 0.0
    %2372 = vmatprep.subr.mxu0 0.0
    %2373 = vmatpush1.msra.mxu0 0.0
    %2374 = vmatprep.subr.mxu0 0.0
    %2375 = vmatpush1.msra.mxu0 0.0
    %2376 = vmatprep.subr.mxu0 0.0
    %2377 = vmatpush1.msra.mxu0 0.0
    %2378 = vmatprep.subr.mxu0 0.0
    %2379 = vmatpush1.msra.mxu0 0.0
    %2380 = vmatprep.subr.mxu0 0.0
    %2381 = vmatpush1.msra.mxu0 0.0
    %2382 = vmatprep.subr.mxu0 0.0
    %2383 = vmatpush1.msra.mxu0 0.0
    %2384 = vmatprep.subr.mxu0 0.0
    %2385 = vmatpush1.msra.mxu0 0.0
    %2386 = vmatprep.subr.mxu0 0.0
    %2387 = vmatpush1.msra.mxu0 0.0
    %2388 = vmatprep.subr.mxu0 0.0
    %2389 = vmatpush1.msra.mxu0 0.0
    %2390 = vmatprep.subr.mxu0 0.0
    %2391 = vmatpush1.msra.mxu0 0.0
    %2392 = vmatprep.subr.mxu0 0.0
    %2393 = vmatpush1.msra.mxu0 0.0
    %2394 = vmatprep.subr.mxu0 0.0
    %2395 = vmatpush1.msra.mxu0 0.0
    %2396 = vmatprep.subr.mxu0 0.0
    %2397 = vmatpush1.msra.mxu0 0.0
    %2398 = vmatprep.subr.mxu0 0.0
    %2399 = vmatpush1.msra.mxu0 0.0
    %2400 = vmatprep.subr.mxu0 0.0
    %2401 = vmatpush1.msra.mxu0 0.0
    %2402 = vmatprep.subr.mxu0 0.0
    %2403 = vmatpush1.msra.mxu0 0.0
    %2404 = vmatprep.subr.mxu0 0.0
    %2405 = vmatpush1.msra.mxu0 0.0
    %2406 = vmatprep.subr.mxu0 0.0
    %2407 = vmatpush1.msra.mxu0 0.0
    %2408 = vmatprep.subr.mxu0 0.0
    %2409 = vmatpush1.msra.mxu0 0.0
    %2410 = vmatprep.mubr.f32.mxu0 0.0
    %v2411 = vand.u32 %v2114, 4294901760
    %v2412 = vsub.f32 %v2114, %v2411
    %2413 = vmatmul.mubr.f32.gmra.mrb[0].mxu0 %v2412
    %v2414 = vpop.f32.mrb[0].mxu0
    %v2415 = vadd.f32 %v2317, %v2414
    %v2416 = vpop.f32.mrb[0].mxu0
    %2417 = vmatprep.mubr.f32.mxu0 0.0
    %v2418 = vand.u32 %v2117, 4294901760
    %v2419 = vsub.f32 %v2117, %v2418
    %2420 = vmatmul.mubr.f32.gmra.mrb[0].mxu0 %v2419
    %v2421 = vpop.f32.mrb[0].mxu0
    %v2422 = vadd.f32 %v2323, %v2421
    %v2423 = vpop.f32.mrb[0].mxu0
    %2424 = vmatprep.mubr.f32.mxu0 0.0
    %v2425 = vand.u32 %v2120, 4294901760
    %v2426 = vsub.f32 %v2120, %v2425
    %2427 = vmatmul.mubr.f32.gmra.mrb[0].mxu0 %v2426
    %v2428 = vpop.f32.mrb[0].mxu0
    %v2429 = vadd.f32 %v2329, %v2428
    %v2430 = vpop.f32.mrb[0].mxu0
    %2431 = vmatprep.mubr.f32.mxu0 0.0
    %v2432 = vand.u32 %v2123, 4294901760
    %v2433 = vsub.f32 %v2123, %v2432
    %2434 = vmatmul.mubr.f32.gmra.mrb[0].mxu0 %v2433
    %v2435 = vpop.f32.mrb[0].mxu0
    %v2436 = vadd.f32 %v2335, %v2435
    %v2437 = vpop.f32.mrb[0].mxu0
    %2438 = vmatprep.mubr.f32.mxu0 0.0
    %v2439 = vand.u32 %v2126, 4294901760
    %v2440 = vsub.f32 %v2126, %v2439
    %2441 = vmatmul.mubr.f32.gmra.mrb[0].mxu0 %v2440
    %v2442 = vpop.f32.mrb[0].mxu0
    %v2443 = vadd.f32 %v2341, %v2442
    %v2444 = vpop.f32.mrb[0].mxu0
    %2445 = vdwg.mxu0
    %2446 = vmatprep.subr.mxu0 0.0
    %v2447 = vand.u32 %v1433, 4294901760
    %2448 = vmatpush1.msra.mxu0 %v2447
    %2449 = vmatprep.subr.mxu0 0.0
    %2450 = vmatpush1.msra.mxu0 0.0
    %2451 = vmatprep.subr.mxu0 0.0
    %2452 = vmatpush1.msra.mxu0 0.0
    %2453 = vmatprep.subr.mxu0 0.0
    %2454 = vmatpush1.msra.mxu0 0.0
    %2455 = vmatprep.subr.mxu0 0.0
    %2456 = vmatpush1.msra.mxu0 0.0
    %2457 = vmatprep.subr.mxu0 0.0
    %2458 = vmatpush1.msra.mxu0 0.0
    %2459 = vmatprep.subr.mxu0 0.0
    %2460 = vmatpush1.msra.mxu0 0.0
    %2461 = vmatprep.subr.mxu0 0.0
    %2462 = vmatpush1.msra.mxu0 0.0
    %2463 = vmatprep.subr.mxu0 0.0
    %2464 = vmatpush1.msra.mxu0 0.0
    %2465 = vmatprep.subr.mxu0 0.0
    %2466 = vmatpush1.msra.mxu0 0.0
    %2467 = vmatprep.subr.mxu0 0.0
    %2468 = vmatpush1.msra.mxu0 0.0
    %2469 = vmatprep.subr.mxu0 0.0
    %2470 = vmatpush1.msra.mxu0 0.0
    %2471 = vmatprep.subr.mxu0 0.0
    %2472 = vmatpush1.msra.mxu0 0.0
    %2473 = vmatprep.subr.mxu0 0.0
    %2474 = vmatpush1.msra.mxu0 0.0
    %2475 = vmatprep.subr.mxu0 0.0
    %2476 = vmatpush1.msra.mxu0 0.0
    %2477 = vmatprep.subr.mxu0 0.0
    %2478 = vmatpush1.msra.mxu0 0.0
    %2479 = vmatprep.subr.mxu0 0.0
    %2480 = vmatpush1.msra.mxu0 0.0
    %2481 = vmatprep.subr.mxu0 0.0
    %2482 = vmatpush1.msra.mxu0 0.0
    %2483 = vmatprep.subr.mxu0 0.0
    %2484 = vmatpush1.msra.mxu0 0.0
    %2485 = vmatprep.subr.mxu0 0.0
    %2486 = vmatpush1.msra.mxu0 0.0
    %2487 = vmatprep.subr.mxu0 0.0
    %2488 = vmatpush1.msra.mxu0 0.0
    %2489 = vmatprep.subr.mxu0 0.0
    %2490 = vmatpush1.msra.mxu0 0.0
    %2491 = vmatprep.subr.mxu0 0.0
    %2492 = vmatpush1.msra.mxu0 0.0
    %2493 = vmatprep.subr.mxu0 0.0
    %2494 = vmatpush1.msra.mxu0 0.0
    %2495 = vmatprep.subr.mxu0 0.0
    %2496 = vmatpush1.msra.mxu0 0.0
    %2497 = vmatprep.subr.mxu0 0.0
    %2498 = vmatpush1.msra.mxu0 0.0
    %2499 = vmatprep.subr.mxu0 0.0
    %2500 = vmatpush1.msra.mxu0 0.0
    %2501 = vmatprep.subr.mxu0 0.0
    %2502 = vmatpush1.msra.mxu0 0.0
    %2503 = vmatprep.subr.mxu0 0.0
    %2504 = vmatpush1.msra.mxu0 0.0
    %2505 = vmatprep.subr.mxu0 0.0
    %2506 = vmatpush1.msra.mxu0 0.0
    %2507 = vmatprep.subr.mxu0 0.0
    %2508 = vmatpush1.msra.mxu0 0.0
    %2509 = vmatprep.subr.mxu0 0.0
    %2510 = vmatpush1.msra.mxu0 0.0
    %2511 = vmatprep.mubr.f32.mxu0 0.0
    %v2512 = vand.u32 %v2114, 4294901760
    %v2513 = vsub.f32 %v2114, %v2512
    %v2514 = vand.u32 %v2513, 4294901760
    %2515 = vmatmul.mubr.f32.gmra.mrb[0].mxu0 %v2514
    %v2516 = vpop.f32.mrb[0].mxu0
    %v2517 = vadd.f32 %v2415, %v2516
    %v2518 = vpop.f32.mrb[0].mxu0
    %2519 = vmatprep.mubr.f32.mxu0 0.0
    %v2520 = vand.u32 %v2117, 4294901760
    %v2521 = vsub.f32 %v2117, %v2520
    %v2522 = vand.u32 %v2521, 4294901760
    %2523 = vmatmul.mubr.f32.gmra.mrb[0].mxu0 %v2522
    %v2524 = vpop.f32.mrb[0].mxu0
    %v2525 = vadd.f32 %v2422, %v2524
    %v2526 = vpop.f32.mrb[0].mxu0
    %2527 = vmatprep.mubr.f32.mxu0 0.0
    %v2528 = vand.u32 %v2120, 4294901760
    %v2529 = vsub.f32 %v2120, %v2528
    %v2530 = vand.u32 %v2529, 4294901760
    %2531 = vmatmul.mubr.f32.gmra.mrb[0].mxu0 %v2530
    %v2532 = vpop.f32.mrb[0].mxu0
    %v2533 = vadd.f32 %v2429, %v2532
    %v2534 = vpop.f32.mrb[0].mxu0
    %2535 = vmatprep.mubr.f32.mxu0 0.0
    %v2536 = vand.u32 %v2123, 4294901760
    %v2537 = vsub.f32 %v2123, %v2536
    %v2538 = vand.u32 %v2537, 4294901760
    %2539 = vmatmul.mubr.f32.gmra.mrb[0].mxu0 %v2538
    %v2540 = vpop.f32.mrb[0].mxu0
    %v2541 = vadd.f32 %v2436, %v2540
    %v2542 = vpop.f32.mrb[0].mxu0
    %2543 = vmatprep.mubr.f32.mxu0 0.0
    %v2544 = vand.u32 %v2126, 4294901760
    %v2545 = vsub.f32 %v2126, %v2544
    %v2546 = vand.u32 %v2545, 4294901760
    %2547 = vmatmul.mubr.f32.gmra.mrb[0].mxu0 %v2546
    %v2548 = vpop.f32.mrb[0].mxu0
    %v2549 = vadd.f32 %v2443, %v2548
    %v2550 = vpop.f32.mrb[0].mxu0
    %2551 = vdwg.mxu0
    %2552 = vmatprep.subr.mxu0 0.0
    %v2553 = vand.u32 %v1433, 4294901760
    %v2554 = vsub.f32 %v1433, %v2553
    %v2555 = vand.u32 %v2554, 4294901760
    %2556 = vmatpush1.msra.mxu0 %v2555
    %2557 = vmatprep.subr.mxu0 0.0
    %2558 = vmatpush1.msra.mxu0 0.0
    %2559 = vmatprep.subr.mxu0 0.0
    %2560 = vmatpush1.msra.mxu0 0.0
    %2561 = vmatprep.subr.mxu0 0.0
    %2562 = vmatpush1.msra.mxu0 0.0
    %2563 = vmatprep.subr.mxu0 0.0
    %2564 = vmatpush1.msra.mxu0 0.0
    %2565 = vmatprep.subr.mxu0 0.0
    %2566 = vmatpush1.msra.mxu0 0.0
    %2567 = vmatprep.subr.mxu0 0.0
    %2568 = vmatpush1.msra.mxu0 0.0
    %2569 = vmatprep.subr.mxu0 0.0
    %2570 = vmatpush1.msra.mxu0 0.0
    %2571 = vmatprep.subr.mxu0 0.0
    %2572 = vmatpush1.msra.mxu0 0.0
    %2573 = vmatprep.subr.mxu0 0.0
    %2574 = vmatpush1.msra.mxu0 0.0
    %2575 = vmatprep.subr.mxu0 0.0
    %2576 = vmatpush1.msra.mxu0 0.0
    %2577 = vmatprep.subr.mxu0 0.0
    %2578 = vmatpush1.msra.mxu0 0.0
    %2579 = vmatprep.subr.mxu0 0.0
    %2580 = vmatpush1.msra.mxu0 0.0
    %2581 = vmatprep.subr.mxu0 0.0
    %2582 = vmatpush1.msra.mxu0 0.0
    %2583 = vmatprep.subr.mxu0 0.0
    %2584 = vmatpush1.msra.mxu0 0.0
    %2585 = vmatprep.subr.mxu0 0.0
    %2586 = vmatpush1.msra.mxu0 0.0
    %2587 = vmatprep.subr.mxu0 0.0
    %2588 = vmatpush1.msra.mxu0 0.0
    %2589 = vmatprep.subr.mxu0 0.0
    %2590 = vmatpush1.msra.mxu0 0.0
    %2591 = vmatprep.subr.mxu0 0.0
    %2592 = vmatpush1.msra.mxu0 0.0
    %2593 = vmatprep.subr.mxu0 0.0
    %2594 = vmatpush1.msra.mxu0 0.0
    %2595 = vmatprep.subr.mxu0 0.0
    %2596 = vmatpush1.msra.mxu0 0.0
    %2597 = vmatprep.subr.mxu0 0.0
    %2598 = vmatpush1.msra.mxu0 0.0
    %2599 = vmatprep.subr.mxu0 0.0
    %2600 = vmatpush1.msra.mxu0 0.0
    %2601 = vmatprep.subr.mxu0 0.0
    %2602 = vmatpush1.msra.mxu0 0.0
    %2603 = vmatprep.subr.mxu0 0.0
    %2604 = vmatpush1.msra.mxu0 0.0
    %2605 = vmatprep.subr.mxu0 0.0
    %2606 = vmatpush1.msra.mxu0 0.0
    %2607 = vmatprep.subr.mxu0 0.0
    %2608 = vmatpush1.msra.mxu0 0.0
    %2609 = vmatprep.subr.mxu0 0.0
    %2610 = vmatpush1.msra.mxu0 0.0
    %2611 = vmatprep.subr.mxu0 0.0
    %2612 = vmatpush1.msra.mxu0 0.0
    %2613 = vmatprep.subr.mxu0 0.0
    %2614 = vmatpush1.msra.mxu0 0.0
    %2615 = vmatprep.subr.mxu0 0.0
    %2616 = vmatpush1.msra.mxu0 0.0
    %2617 = vmatprep.subr.mxu0 0.0
    %2618 = vmatpush1.msra.mxu0 0.0
    %2619 = vmatprep.mubr.f32.mxu0 0.0
    %v2620 = vand.u32 %v2114, 4294901760
    %2621 = vmatmul.mubr.f32.gmra.mrb[0].mxu0 %v2620
    %v2622 = vpop.f32.mrb[0].mxu0
    %v2623 = vadd.f32 %v2517, %v2622
    %v2624 = vpop.f32.mrb[0].mxu0
    %2625 = vmatprep.mubr.f32.mxu0 0.0
    %v2626 = vand.u32 %v2117, 4294901760
    %2627 = vmatmul.mubr.f32.gmra.mrb[0].mxu0 %v2626
    %v2628 = vpop.f32.mrb[0].mxu0
    %v2629 = vadd.f32 %v2525, %v2628
    %v2630 = vpop.f32.mrb[0].mxu0
    %2631 = vmatprep.mubr.f32.mxu0 0.0
    %v2632 = vand.u32 %v2120, 4294901760
    %2633 = vmatmul.mubr.f32.gmra.mrb[0].mxu0 %v2632
    %v2634 = vpop.f32.mrb[0].mxu0
    %v2635 = vadd.f32 %v2533, %v2634
    %v2636 = vpop.f32.mrb[0].mxu0
    %2637 = vmatprep.mubr.f32.mxu0 0.0
    %v2638 = vand.u32 %v2123, 4294901760
    %2639 = vmatmul.mubr.f32.gmra.mrb[0].mxu0 %v2638
    %v2640 = vpop.f32.mrb[0].mxu0
    %v2641 = vadd.f32 %v2541, %v2640
    %v2642 = vpop.f32.mrb[0].mxu0
    %2643 = vmatprep.mubr.f32.mxu0 0.0
    %v2644 = vand.u32 %v2126, 4294901760
    %2645 = vmatmul.mubr.f32.gmra.mrb[0].mxu0 %v2644
    %v2646 = vpop.f32.mrb[0].mxu0
    %v2647 = vadd.f32 %v2549, %v2646
    %v2648 = vpop.f32.mrb[0].mxu0
    %2649 = vdwg.mxu0
    %2650 = vmatprep.subr.mxu0 0.0
    %v2651 = vand.u32 %v1433, 4294901760
    %2652 = vmatpush1.msra.mxu0 %v2651
    %2653 = vmatprep.subr.mxu0 0.0
    %2654 = vmatpush1.msra.mxu0 0.0
    %2655 = vmatprep.subr.mxu0 0.0
    %2656 = vmatpush1.msra.mxu0 0.0
    %2657 = vmatprep.subr.mxu0 0.0
    %2658 = vmatpush1.msra.mxu0 0.0
    %2659 = vmatprep.subr.mxu0 0.0
    %2660 = vmatpush1.msra.mxu0 0.0
    %2661 = vmatprep.subr.mxu0 0.0
    %2662 = vmatpush1.msra.mxu0 0.0
    %2663 = vmatprep.subr.mxu0 0.0
    %2664 = vmatpush1.msra.mxu0 0.0
    %2665 = vmatprep.subr.mxu0 0.0
    %2666 = vmatpush1.msra.mxu0 0.0
    %2667 = vmatprep.subr.mxu0 0.0
    %2668 = vmatpush1.msra.mxu0 0.0
    %2669 = vmatprep.subr.mxu0 0.0
    %2670 = vmatpush1.msra.mxu0 0.0
    %2671 = vmatprep.subr.mxu0 0.0
    %2672 = vmatpush1.msra.mxu0 0.0
    %2673 = vmatprep.subr.mxu0 0.0
    %2674 = vmatpush1.msra.mxu0 0.0
    %2675 = vmatprep.subr.mxu0 0.0
    %2676 = vmatpush1.msra.mxu0 0.0
    %2677 = vmatprep.subr.mxu0 0.0
    %2678 = vmatpush1.msra.mxu0 0.0
    %2679 = vmatprep.subr.mxu0 0.0
    %2680 = vmatpush1.msra.mxu0 0.0
    %2681 = vmatprep.subr.mxu0 0.0
    %2682 = vmatpush1.msra.mxu0 0.0
    %2683 = vmatprep.subr.mxu0 0.0
    %2684 = vmatpush1.msra.mxu0 0.0
    %2685 = vmatprep.subr.mxu0 0.0
    %2686 = vmatpush1.msra.mxu0 0.0
    %2687 = vmatprep.subr.mxu0 0.0
    %2688 = vmatpush1.msra.mxu0 0.0
    %2689 = vmatprep.subr.mxu0 0.0
    %2690 = vmatpush1.msra.mxu0 0.0
    %2691 = vmatprep.subr.mxu0 0.0
    %2692 = vmatpush1.msra.mxu0 0.0
    %2693 = vmatprep.subr.mxu0 0.0
    %2694 = vmatpush1.msra.mxu0 0.0
    %2695 = vmatprep.subr.mxu0 0.0
    %2696 = vmatpush1.msra.mxu0 0.0
    %2697 = vmatprep.subr.mxu0 0.0
    %2698 = vmatpush1.msra.mxu0 0.0
    %2699 = vmatprep.subr.mxu0 0.0
    %2700 = vmatpush1.msra.mxu0 0.0
    %2701 = vmatprep.subr.mxu0 0.0
    %2702 = vmatpush1.msra.mxu0 0.0
    %2703 = vmatprep.subr.mxu0 0.0
    %2704 = vmatpush1.msra.mxu0 0.0
    %2705 = vmatprep.subr.mxu0 0.0
    %2706 = vmatpush1.msra.mxu0 0.0
    %2707 = vmatprep.subr.mxu0 0.0
    %2708 = vmatpush1.msra.mxu0 0.0
    %2709 = vmatprep.subr.mxu0 0.0
    %2710 = vmatpush1.msra.mxu0 0.0
    %2711 = vmatprep.subr.mxu0 0.0
    %2712 = vmatpush1.msra.mxu0 0.0
    %2713 = vmatprep.subr.mxu0 0.0
    %2714 = vmatpush1.msra.mxu0 0.0
    %2715 = vmatprep.mubr.f32.mxu0 0.0
    %v2716 = vand.u32 %v2114, 4294901760
    %2717 = vmatmul.mubr.f32.gmra.mrb[0].mxu0 %v2716
    %v2718 = vpop.f32.mrb[0].mxu0
    %v2719 = vadd.f32 %v2623, %v2718
    %v2720 = vpop.f32.mrb[0].mxu0
    %2721 = vmatprep.mubr.f32.mxu0 0.0
    %v2722 = vand.u32 %v2117, 4294901760
    %2723 = vmatmul.mubr.f32.gmra.mrb[0].mxu0 %v2722
    %v2724 = vpop.f32.mrb[0].mxu0
    %v2725 = vadd.f32 %v2629, %v2724
    %v2726 = vpop.f32.mrb[0].mxu0
    %2727 = vmatprep.mubr.f32.mxu0 0.0
    %v2728 = vand.u32 %v2120, 4294901760
    %2729 = vmatmul.mubr.f32.gmra.mrb[0].mxu0 %v2728
    %v2730 = vpop.f32.mrb[0].mxu0
    %v2731 = vadd.f32 %v2635, %v2730
    %v2732 = vpop.f32.mrb[0].mxu0
    %2733 = vmatprep.mubr.f32.mxu0 0.0
    %v2734 = vand.u32 %v2123, 4294901760
    %2735 = vmatmul.mubr.f32.gmra.mrb[0].mxu0 %v2734
    %v2736 = vpop.f32.mrb[0].mxu0
    %v2737 = vadd.f32 %v2641, %v2736
    %v2738 = vpop.f32.mrb[0].mxu0
    %2739 = vmatprep.mubr.f32.mxu0 0.0
    %v2740 = vand.u32 %v2126, 4294901760
    %2741 = vmatmul.mubr.f32.gmra.mrb[0].mxu0 %v2740
    %v2742 = vpop.f32.mrb[0].mxu0
    %v2743 = vadd.f32 %v2647, %v2742
    %v2744 = vpop.f32.mrb[0].mxu0
    %2745 = vdwg.mxu0
    %2746 = vst [vmem:[%s4] sm:$0xff] %v2719
    %2747 = vst [vmem:[%s4 + $0x8] sm:$0xff] %v2725
    %2748 = vst [vmem:[%s4 + $0x10] sm:$0xff] %v2731
    %2749 = vst [vmem:[%s4 + $0x18] sm:$0xff] %v2737
    %2750 = vst [vmem:[%s4 + $0x20] sm:$0x3] %v2743
    // Predicated region
    $region22: #{gcn_forward.1} parent=1 // pred_check
      _
    $region23: #{gcn_forward.1} parent=1 // pred_check_branch
      %2752 = sbr.rel (0) target = $region25
    $region24: #{gcn_forward.1} parent=1 // pred_region
      _
    $region25: #{gcn_forward.1} parent=1 // pred_fallthru
      _
    // Predicated region
    $region26: #{gcn_forward.1} parent=1 // pred_check
      _
    $region27: #{gcn_forward.1} parent=1 // pred_check_branch
      %2754 = sbr.rel (0) target = $region29
    $region28: #{gcn_forward.1} parent=1 // pred_region
      _
    $region29: #{gcn_forward.1} parent=1 // pred_fallthru
      _
    %2755 = vsyncpa [#allocation3], 1

</llo_original>
